<compile_context>
chip_gen: v6e
topology: v6e:2x2x1
jax: 0.10.0
libtpu: 0.0.40
codegen_flags: <defaults>
</compile_context>

<pallas_src>
import jax
import jax.numpy as jnp
from jax.experimental import pallas as pl
from jax.experimental.pallas import tpu as pltpu

DIM_STATE = 8          # LunarLanderContinuous-v2 observation dim
H1, H2, OUT = 400, 200, 1
H1P, H2P = 512, 256    # lane-aligned padded hidden sizes


def _round_up(x, m):
    return (x + m - 1) // m * m


def critic_kernel(xt_ref, w1_ref, b1_ref, w2_ref, b2_ref, w3_ref, b3_ref, o_ref):
    # xt_ref: (8, TB) bf16 (batch on lanes).  Weights are (out, in) bf16, biases (out, 1) f32.
    xt = xt_ref[...]                                                          # (8, TB) bf16
    h1 = jnp.dot(w1_ref[...], xt, preferred_element_type=jnp.float32)         # (512, TB) f32
    h1 = jnp.maximum(h1 + b1_ref[...], 0.0)                                   # bias+ReLU in f32
    h2 = jnp.dot(w2_ref[...], h1.astype(jnp.bfloat16),
                 preferred_element_type=jnp.float32)                          # (256, TB) f32
    h2 = jnp.maximum(h2 + b2_ref[...], 0.0)
    y = jnp.dot(w3_ref[...], h2.astype(jnp.bfloat16),
                preferred_element_type=jnp.float32)                           # (1, TB) f32
    o_ref[...] = (y + b3_ref[...]).astype(o_ref.dtype)                        # lane-dense store


def critic_forward(state, params, *, block_b=1024):
    """state: (B, DIM_STATE) f32. params: output of prepare_params().
    Returns (B, 1) f32 value estimates (same semantics as the PyTorch Critic.forward)."""
    w1t, b1, w2t, b2, w3t, b3 = params
    B = state.shape[0]
    tb = min(block_b, _round_up(max(B, 1), 128))     # lane-multiple batch tile
    b_pad = _round_up(B, tb)

    # Transpose to batch-on-lanes and cast the matmul LHS stream to bf16 (fused by XLA).
    xt = jnp.transpose(state.astype(jnp.float32)).astype(jnp.bfloat16)        # (8, B)
    if b_pad != B:
        xt = jnp.pad(xt, ((0, 0), (0, b_pad - B)))

    resident = lambda i: (0, 0)    # constant block index => weights/biases stay VMEM-resident

    out = pl.pallas_call(
        critic_kernel,
        out_shape=jax.ShapeDtypeStruct((1, b_pad), jnp.float32),
        grid=(b_pad // tb,),
        in_specs=[
            pl.BlockSpec((DIM_STATE, tb), lambda i: (0, i)),   # x tile streams per grid step
            pl.BlockSpec((H1P, DIM_STATE), resident),          # w1^T  (512, 8)   bf16
            pl.BlockSpec((H1P, 1), resident),                  # b1    (512, 1)   f32
            pl.BlockSpec((H2P, H1P), resident),                # w2^T  (256, 512) bf16
            pl.BlockSpec((H2P, 1), resident),                  # b2    (256, 1)   f32
            pl.BlockSpec((OUT, H2P), resident),                # w3^T  (1, 256)   bf16
            pl.BlockSpec((OUT, 1), resident),                  # b3    (1, 1)     f32
        ],
        out_specs=pl.BlockSpec((1, tb), lambda i: (0, i)),     # lane-dense output slab
        compiler_params=pltpu.CompilerParams(
            dimension_semantics=("parallel",)),                # batch axis -> both TCs on v7x
    )(xt, w1t, b1, w2t, b2, w3t, b3)

    # (1, b_pad) -> (B, 1): contiguity-preserving slice + reshape outside the kernel.
    return out[0, :B].reshape(B, 1)


def init_params(key):
    """Deterministic init mimicking nn.Linear default (uniform +-1/sqrt(fan_in)).
    Weights are stored math-style as (in, out); bias as (out,)."""
    ks = jax.random.split(key, 6)

    def lin(kw, kb, fan_in, fan_out):
        bound = 1.0 / jnp.sqrt(jnp.float32(fan_in))
        w = jax.random.uniform(kw, (fan_in, fan_out), jnp.float32, -bound, bound)
        b = jax.random.uniform(kb, (fan_out,), jnp.float32, -bound, bound)
        return w, b

    w1, b1 = lin(ks[0], ks[1], DIM_STATE, H1)
    w2, b2 = lin(ks[2], ks[3], H1, H2)
    w3, b3 = lin(ks[4], ks[5], H2, OUT)
    return (w1, b1, w2, b2, w3, b3)


def prepare_params(params):
    """Zero-pad hidden dims to lane multiples (400->512, 200->256), transpose weights to
    (out, in) for the batch-on-lanes kernel, and cast weights to bf16. Biases stay f32
    as (out, 1) columns. Zero padding is exact: padded biases are 0 and ReLU(0)=0."""
    w1, b1, w2, b2, w3, b3 = params
    w1p = jnp.zeros((DIM_STATE, H1P), jnp.float32).at[:, :H1].set(w1)
    b1p = jnp.zeros((H1P,), jnp.float32).at[:H1].set(b1)
    w2p = jnp.zeros((H1P, H2P), jnp.float32).at[:H1, :H2].set(w2)
    b2p = jnp.zeros((H2P,), jnp.float32).at[:H2].set(b2)
    w3p = jnp.zeros((H2P, OUT), jnp.float32).at[:H2, :].set(w3)
    return (
        w1p.T.astype(jnp.bfloat16),      # (H1P, 8)
        b1p.reshape(H1P, 1),             # (H1P, 1)
        w2p.T.astype(jnp.bfloat16),      # (H2P, H1P)
        b2p.reshape(H2P, 1),             # (H2P, 1)
        w3p.T.astype(jnp.bfloat16),      # (1, H2P)
        b3.reshape(OUT, 1),              # (1, 1)
    )


if __name__ == "__main__":
    key = jax.random.PRNGKey(0)
    k_params, k_state = jax.random.split(key)

    raw = init_params(k_params)
    params = prepare_params(raw)

    batch = 8
    state = jax.random.normal(k_state, (batch, DIM_STATE), jnp.float32)

    out = critic_forward(state, params)
    out = jax.block_until_ready(out)
    assert out.shape == (batch, 1)

    # Reference with the exact same bf16-operand / f32-accumulate recipe as the kernel.
    w1t, b1c, w2t, b2c, w3t, b3c = params
    xt = state.T.astype(jnp.bfloat16)
    h1 = jnp.maximum(jnp.dot(w1t, xt, preferred_element_type=jnp.float32) + b1c, 0.0)
    h2 = jnp.maximum(jnp.dot(w2t, h1.astype(jnp.bfloat16),
                             preferred_element_type=jnp.float32) + b2c, 0.0)
    ref = (jnp.dot(w3t, h2.astype(jnp.bfloat16),
                   preferred_element_type=jnp.float32) + b3c).T                # (B, 1)
    assert jnp.allclose(out, ref, atol=2e-3, rtol=2e-3), float(jnp.max(jnp.abs(out - ref)))

    # Loose sanity check against the original full-f32, unpadded math (bf16 weights
    # introduce a small relative error).
    w1, b1r, w2, b2r, w3, b3r = raw
    f32 = jnp.maximum(state @ w1 + b1r, 0.0)
    f32 = jnp.maximum(f32 @ w2 + b2r, 0.0)
    f32 = f32 @ w3 + b3r
    assert jnp.allclose(out, f32, atol=5e-2, rtol=5e-2), float(jnp.max(jnp.abs(out - f32)))

    print("KERNEL_OK")
</pallas_src>

<mosaic_0001>
module attributes {stable_mosaic.version = 11 : i64} {
  func.func @critic_kernel(%arg0: i32, %arg1: memref<8x128xbf16, #tpu.memory_space<vmem>>, %arg2: memref<512x8xbf16, #tpu.memory_space<vmem>>, %arg3: memref<512x1xf32, #tpu.memory_space<vmem>>, %arg4: memref<256x512xbf16, #tpu.memory_space<vmem>>, %arg5: memref<256x1xf32, #tpu.memory_space<vmem>>, %arg6: memref<1x256xbf16, #tpu.memory_space<vmem>>, %arg7: memref<1x1xf32, #tpu.memory_space<vmem>>, %arg8: memref<1x128xf32, #tpu.memory_space<vmem>>) attributes {dimension_semantics = [#tpu.dimension_semantics<parallel>], iteration_bounds = array<i64: 1>, scalar_prefetch = 0 : i64, scratch_operands = 0 : i64, tpu.core_type = #tpu.core_type<tc>, window_params = [{transform_indices = @transform_0, window_bounds = array<i64: 8, 128>}, {pipeline_mode = #tpu.pipeline_mode<synchronous>, transform_indices = @transform_1, window_bounds = array<i64: 512, 8>}, {pipeline_mode = #tpu.pipeline_mode<synchronous>, transform_indices = @transform_2, window_bounds = array<i64: 512, 1>}, {pipeline_mode = #tpu.pipeline_mode<synchronous>, transform_indices = @transform_3, window_bounds = array<i64: 256, 512>}, {pipeline_mode = #tpu.pipeline_mode<synchronous>, transform_indices = @transform_4, window_bounds = array<i64: 256, 1>}, {pipeline_mode = #tpu.pipeline_mode<synchronous>, transform_indices = @transform_5, window_bounds = array<i64: 1, 256>}, {pipeline_mode = #tpu.pipeline_mode<synchronous>, transform_indices = @transform_6, window_bounds = array<i64: 1, 1>}, {transform_indices = @transform_7, window_bounds = array<i64: 1, 128>}]} {
    %c0 = arith.constant 0 : index
    %c0_0 = arith.constant 0 : index
    %0 = vector.load %arg1[%c0, %c0_0] : memref<8x128xbf16, #tpu.memory_space<vmem>>, vector<8x128xbf16>
    %c0_1 = arith.constant 0 : index
    %c0_2 = arith.constant 0 : index
    %1 = vector.load %arg2[%c0_1, %c0_2] : memref<512x8xbf16, #tpu.memory_space<vmem>>, vector<512x8xbf16>
    %cst = arith.constant dense<0.000000e+00> : vector<512x128xf32>
    %2 = tpu.matmul %1, %0, %cst {dimension_numbers = #tpu.dot_dimension_numbers<[1], [0], [0], [1], [0, 0, 1, 1], [], []>} : vector<512x8xbf16>, vector<8x128xbf16>, vector<512x128xf32> -> vector<512x128xf32>
    %c0_3 = arith.constant 0 : index
    %c0_4 = arith.constant 0 : index
    %3 = vector.load %arg3[%c0_3, %c0_4] : memref<512x1xf32, #tpu.memory_space<vmem>>, vector<512x1xf32>
    %4 = vector.broadcast %3 : vector<512x1xf32> to vector<512x128xf32>
    %5 = arith.addf %2, %4 : vector<512x128xf32>
    %cst_5 = arith.constant 0.000000e+00 : f32
    %6 = vector.broadcast %cst_5 : f32 to vector<512x128xf32>
    %7 = arith.maximumf %5, %6 : vector<512x128xf32>
    %c0_6 = arith.constant 0 : index
    %c0_7 = arith.constant 0 : index
    %8 = vector.load %arg4[%c0_6, %c0_7] : memref<256x512xbf16, #tpu.memory_space<vmem>>, vector<256x512xbf16>
    %9 = arith.truncf %7 : vector<512x128xf32> to vector<512x128xbf16>
    %cst_8 = arith.constant dense<0.000000e+00> : vector<256x128xf32>
    %10 = tpu.matmul %8, %9, %cst_8 {dimension_numbers = #tpu.dot_dimension_numbers<[1], [0], [0], [1], [0, 0, 1, 1], [], []>} : vector<256x512xbf16>, vector<512x128xbf16>, vector<256x128xf32> -> vector<256x128xf32>
    %c0_9 = arith.constant 0 : index
    %c0_10 = arith.constant 0 : index
    %11 = vector.load %arg5[%c0_9, %c0_10] : memref<256x1xf32, #tpu.memory_space<vmem>>, vector<256x1xf32>
    %12 = vector.broadcast %11 : vector<256x1xf32> to vector<256x128xf32>
    %13 = arith.addf %10, %12 : vector<256x128xf32>
    %cst_11 = arith.constant 0.000000e+00 : f32
    %14 = vector.broadcast %cst_11 : f32 to vector<256x128xf32>
    %15 = arith.maximumf %13, %14 : vector<256x128xf32>
    %c0_12 = arith.constant 0 : index
    %c0_13 = arith.constant 0 : index
    %16 = vector.load %arg6[%c0_12, %c0_13] : memref<1x256xbf16, #tpu.memory_space<vmem>>, vector<1x256xbf16>
    %17 = arith.truncf %15 : vector<256x128xf32> to vector<256x128xbf16>
    %cst_14 = arith.constant dense<0.000000e+00> : vector<1x128xf32>
    %18 = tpu.matmul %16, %17, %cst_14 {dimension_numbers = #tpu.dot_dimension_numbers<[1], [0], [0], [1], [0, 0, 1, 1], [], []>} : vector<1x256xbf16>, vector<256x128xbf16>, vector<1x128xf32> -> vector<1x128xf32>
    %c0_15 = arith.constant 0 : index
    %c0_16 = arith.constant 0 : index
    %19 = vector.load %arg7[%c0_15, %c0_16] : memref<1x1xf32, #tpu.memory_space<vmem>>, vector<1x1xf32>
    %20 = vector.broadcast %19 : vector<1x1xf32> to vector<1x128xf32>
    %21 = arith.addf %18, %20 : vector<1x128xf32>
    %c0_17 = arith.constant 0 : index
    %c0_18 = arith.constant 0 : index
    %22 = vector.load %arg8[%c0_17, %c0_18] : memref<1x128xf32, #tpu.memory_space<vmem>>, vector<1x128xf32>
    tpu.vector_store %arg8[%c0_17, %c0_18], %21 {strides = array<i32>} : memref<1x128xf32, #tpu.memory_space<vmem>>, vector<1x128xf32>,
    return
  }
  func.func @transform_0(%arg0: i32) -> (i32, i32) {
    %c0_i32 = arith.constant 0 : i32
    %c0_i32_0 = arith.constant 0 : i32
    return %c0_i32, %arg0 : i32, i32
  }
  func.func @transform_1(%arg0: i32) -> (i32, i32) {
    %c0_i32 = arith.constant 0 : i32
    %c0_i32_0 = arith.constant 0 : i32
    %c0_i32_1 = arith.constant 0 : i32
    return %c0_i32, %c0_i32_0 : i32, i32
  }
  func.func @transform_2(%arg0: i32) -> (i32, i32) {
    %c0_i32 = arith.constant 0 : i32
    %c0_i32_0 = arith.constant 0 : i32
    %c0_i32_1 = arith.constant 0 : i32
    return %c0_i32, %c0_i32_0 : i32, i32
  }
  func.func @transform_3(%arg0: i32) -> (i32, i32) {
    %c0_i32 = arith.constant 0 : i32
    %c0_i32_0 = arith.constant 0 : i32
    %c0_i32_1 = arith.constant 0 : i32
    return %c0_i32, %c0_i32_0 : i32, i32
  }
  func.func @transform_4(%arg0: i32) -> (i32, i32) {
    %c0_i32 = arith.constant 0 : i32
    %c0_i32_0 = arith.constant 0 : i32
    %c0_i32_1 = arith.constant 0 : i32
    return %c0_i32, %c0_i32_0 : i32, i32
  }
  func.func @transform_5(%arg0: i32) -> (i32, i32) {
    %c0_i32 = arith.constant 0 : i32
    %c0_i32_0 = arith.constant 0 : i32
    %c0_i32_1 = arith.constant 0 : i32
    return %c0_i32, %c0_i32_0 : i32, i32
  }
  func.func @transform_6(%arg0: i32) -> (i32, i32) {
    %c0_i32 = arith.constant 0 : i32
    %c0_i32_0 = arith.constant 0 : i32
    %c0_i32_1 = arith.constant 0 : i32
    return %c0_i32, %c0_i32_0 : i32, i32
  }
  func.func @transform_7(%arg0: i32) -> (i32, i32) {
    %c0_i32 = arith.constant 0 : i32
    %c0_i32_0 = arith.constant 0 : i32
    return %c0_i32, %arg0 : i32, i32
  }
}

</mosaic_0001>

<llo_original>
// kernel: tpu_custom_call.1
$region0: #{tpu_custom_call.1}
  #allocation0 [shape = 'u32[]', space=smem, size = 0x4, offset = 0x4, fixed_abs, tag = 'smem constant byte address 0x4 - core index']
  #allocation1 [shape = 'u32[144,128]{1,0:T(1,128)}', space=vmem, size = 0x12000, scoped, tag = 'internal scratch']
  #allocation2 [shape = 'f32[1,1]{1,0:T(1,128)S(1)}', space=vmem, size = 0x200, scoped, tag = 'scoped memory for tpu_custom_call.1']
  %s0 = inlined_call_operand.vmem [shape: bf16[8,128], index: 0, kind: input, shape index: {}]
  %s1 = inlined_call_operand.vmem [shape: bf16[512,8], index: 1, kind: input, shape index: {}]
  %s2 = inlined_call_operand.vmem [shape: f32[512,1], index: 2, kind: input, shape index: {}]
  %s3 = inlined_call_operand.vmem [shape: bf16[256,512], index: 3, kind: input, shape index: {}]
  %s4 = inlined_call_operand.vmem [shape: f32[256,1], index: 4, kind: input, shape index: {}]
  %s5 = inlined_call_operand.vmem [shape: bf16[1,256], index: 5, kind: input, shape index: {}]
  %s6 = inlined_call_operand.<no memory space> [shape: f32[1,1], index: 6, kind: input, shape index: {}]
  %s7 = inlined_call_operand.hbm [shape: f32[1,128], index: 7, kind: output, shape index: {}]
  %s8 = sld [smem:[#allocation0]]
  $region38: #{tpu_custom_call.1} parent=0
    _
  %s10 = ssub.s32 1, %s8
  %s11 = scalar_select 0, %s10, %s8
  %v12 = vstv %s6
  %13 = vst [vmem:[#allocation2] sm:$0x1] %v12
  $region1: #{tpu_custom_call.1} parent=0
    #allocation3 [shape = 'u8[512]{0}', space=vmem, size = 0x400, scoped, tag = 'output window, operand 0, single buffered']
    #allocation4 [shape = 's32[1]{0}', space=sflag, size = 0x4, scoped, tag = 'scoped memory for tpu_custom_call.1']
    %14 = vsyncpa [#allocation4], 0
    // Predicated region
    $region2: #{tpu_custom_call.1} parent=1 // pred_check
      _
    $region3: #{tpu_custom_call.1} parent=1 // pred_check_branch
      %16 = sbr.rel (0) target = $region5
    $region4: #{tpu_custom_call.1} parent=1 // pred_region
      _
    $region5: #{tpu_custom_call.1} parent=1 // pred_fallthru
      _
    // Predicated region
    $region6: #{tpu_custom_call.1} parent=1 // pred_check
      _
    $region7: #{tpu_custom_call.1} parent=1 // pred_check_branch
      %18 = sbr.rel (0) target = $region9
    $region8: #{tpu_custom_call.1} parent=1 // pred_region
      _
    $region9: #{tpu_custom_call.1} parent=1 // pred_fallthru
      _
    // Predicated region
    $region10: #{tpu_custom_call.1} parent=1 // pred_check
      _
    $region11: #{tpu_custom_call.1} parent=1 // pred_check_branch
      %20 = sbr.rel (0) target = $region13
    $region12: #{tpu_custom_call.1} parent=1 // pred_region
      _
    $region13: #{tpu_custom_call.1} parent=1 // pred_fallthru
      _
    // Predicated region
    $region14: #{tpu_custom_call.1} parent=1 // pred_check
      _
    $region15: #{tpu_custom_call.1} parent=1 // pred_check_branch
      %22 = sbr.rel (0) target = $region17
    $region16: #{tpu_custom_call.1} parent=1 // pred_region
      _
    $region17: #{tpu_custom_call.1} parent=1 // pred_fallthru
      _
    // Predicated region
    $region18: #{tpu_custom_call.1} parent=1 // pred_check
      _
    $region19: #{tpu_custom_call.1} parent=1 // pred_check_branch
      %24 = sbr.rel (0) target = $region21
    $region20: #{tpu_custom_call.1} parent=1 // pred_region
      _
    $region21: #{tpu_custom_call.1} parent=1 // pred_fallthru
      _
    // Predicated region
    $region22: #{tpu_custom_call.1} parent=1 // pred_check
      _
    $region23: #{tpu_custom_call.1} parent=1 // pred_check_branch
      %26 = sbr.rel (0) target = $region25
    $region24: #{tpu_custom_call.1} parent=1 // pred_region
      _
    $region25: #{tpu_custom_call.1} parent=1 // pred_fallthru
      _
    // Predicated region
    $region26: #{tpu_custom_call.1} parent=1 // pred_check
      _
    $region27: #{tpu_custom_call.1} parent=1 // pred_check_branch
      %28 = sbr.rel (0) target = $region29
    $region28: #{tpu_custom_call.1} parent=1 // pred_region
      _
    $region29: #{tpu_custom_call.1} parent=1 // pred_fallthru
      _
    %v30 = vld [vmem:[%s0] sm:$0xf]
    %v31 = vld [vmem:[%s1] sm:$0xf]
    %v32 = vld [vmem:[%s1 + $0x4] sm:$0xf]
    %v33 = vld [vmem:[%s1 + $0x8] sm:$0xf]
    %v34 = vld [vmem:[%s1 + $0xc] sm:$0xf]
    %v35 = vld [vmem:[%s1 + $0x10] sm:$0xf]
    %v36 = vld [vmem:[%s1 + $0x14] sm:$0xf]
    %v37 = vld [vmem:[%s1 + $0x18] sm:$0xf]
    %v38 = vld [vmem:[%s1 + $0x1c] sm:$0xf]
    %v39 = vld [vmem:[%s1 + $0x20] sm:$0xf]
    %v40 = vld [vmem:[%s1 + $0x24] sm:$0xf]
    %v41 = vld [vmem:[%s1 + $0x28] sm:$0xf]
    %v42 = vld [vmem:[%s1 + $0x2c] sm:$0xf]
    %v43 = vld [vmem:[%s1 + $0x30] sm:$0xf]
    %v44 = vld [vmem:[%s1 + $0x34] sm:$0xf]
    %v45 = vld [vmem:[%s1 + $0x38] sm:$0xf]
    %v46 = vld [vmem:[%s1 + $0x3c] sm:$0xf]
    %v47 = vld [vmem:[%s1 + $0x40] sm:$0xf]
    %v48 = vld [vmem:[%s1 + $0x44] sm:$0xf]
    %v49 = vld [vmem:[%s1 + $0x48] sm:$0xf]
    %v50 = vld [vmem:[%s1 + $0x4c] sm:$0xf]
    %v51 = vld [vmem:[%s1 + $0x50] sm:$0xf]
    %v52 = vld [vmem:[%s1 + $0x54] sm:$0xf]
    %v53 = vld [vmem:[%s1 + $0x58] sm:$0xf]
    %v54 = vld [vmem:[%s1 + $0x5c] sm:$0xf]
    %v55 = vld [vmem:[%s1 + $0x60] sm:$0xf]
    %v56 = vld [vmem:[%s1 + $0x64] sm:$0xf]
    %v57 = vld [vmem:[%s1 + $0x68] sm:$0xf]
    %v58 = vld [vmem:[%s1 + $0x6c] sm:$0xf]
    %v59 = vld [vmem:[%s1 + $0x70] sm:$0xf]
    %v60 = vld [vmem:[%s1 + $0x74] sm:$0xf]
    %v61 = vld [vmem:[%s1 + $0x78] sm:$0xf]
    %v62 = vld [vmem:[%s1 + $0x7c] sm:$0xf]
    %v63 = vld [vmem:[%s1 + $0x80] sm:$0xf]
    %v64 = vld [vmem:[%s1 + $0x84] sm:$0xf]
    %v65 = vld [vmem:[%s1 + $0x88] sm:$0xf]
    %v66 = vld [vmem:[%s1 + $0x8c] sm:$0xf]
    %v67 = vld [vmem:[%s1 + $0x90] sm:$0xf]
    %v68 = vld [vmem:[%s1 + $0x94] sm:$0xf]
    %v69 = vld [vmem:[%s1 + $0x98] sm:$0xf]
    %v70 = vld [vmem:[%s1 + $0x9c] sm:$0xf]
    %v71 = vld [vmem:[%s1 + $0xa0] sm:$0xf]
    %v72 = vld [vmem:[%s1 + $0xa4] sm:$0xf]
    %v73 = vld [vmem:[%s1 + $0xa8] sm:$0xf]
    %v74 = vld [vmem:[%s1 + $0xac] sm:$0xf]
    %v75 = vld [vmem:[%s1 + $0xb0] sm:$0xf]
    %v76 = vld [vmem:[%s1 + $0xb4] sm:$0xf]
    %v77 = vld [vmem:[%s1 + $0xb8] sm:$0xf]
    %v78 = vld [vmem:[%s1 + $0xbc] sm:$0xf]
    %v79 = vld [vmem:[%s1 + $0xc0] sm:$0xf]
    %v80 = vld [vmem:[%s1 + $0xc4] sm:$0xf]
    %v81 = vld [vmem:[%s1 + $0xc8] sm:$0xf]
    %v82 = vld [vmem:[%s1 + $0xcc] sm:$0xf]
    %v83 = vld [vmem:[%s1 + $0xd0] sm:$0xf]
    %v84 = vld [vmem:[%s1 + $0xd4] sm:$0xf]
    %v85 = vld [vmem:[%s1 + $0xd8] sm:$0xf]
    %v86 = vld [vmem:[%s1 + $0xdc] sm:$0xf]
    %v87 = vld [vmem:[%s1 + $0xe0] sm:$0xf]
    %v88 = vld [vmem:[%s1 + $0xe4] sm:$0xf]
    %v89 = vld [vmem:[%s1 + $0xe8] sm:$0xf]
    %v90 = vld [vmem:[%s1 + $0xec] sm:$0xf]
    %v91 = vld [vmem:[%s1 + $0xf0] sm:$0xf]
    %v92 = vld [vmem:[%s1 + $0xf4] sm:$0xf]
    %v93 = vld [vmem:[%s1 + $0xf8] sm:$0xf]
    %v94 = vld [vmem:[%s1 + $0xfc] sm:$0xf]
    %v95 = vld [vmem:[%s2] sm:$0xff]
    %v96 = vld [vmem:[%s2 + $0x8] sm:$0xff]
    %v97 = vld [vmem:[%s2 + $0x10] sm:$0xff]
    %v98 = vld [vmem:[%s2 + $0x18] sm:$0xff]
    %v99 = vld [vmem:[%s2 + $0x20] sm:$0xff]
    %v100 = vld [vmem:[%s2 + $0x28] sm:$0xff]
    %v101 = vld [vmem:[%s2 + $0x30] sm:$0xff]
    %v102 = vld [vmem:[%s2 + $0x38] sm:$0xff]
    %v103 = vld [vmem:[%s2 + $0x40] sm:$0xff]
    %v104 = vld [vmem:[%s2 + $0x48] sm:$0xff]
    %v105 = vld [vmem:[%s2 + $0x50] sm:$0xff]
    %v106 = vld [vmem:[%s2 + $0x58] sm:$0xff]
    %v107 = vld [vmem:[%s2 + $0x60] sm:$0xff]
    %v108 = vld [vmem:[%s2 + $0x68] sm:$0xff]
    %v109 = vld [vmem:[%s2 + $0x70] sm:$0xff]
    %v110 = vld [vmem:[%s2 + $0x78] sm:$0xff]
    %v111 = vld [vmem:[%s2 + $0x80] sm:$0xff]
    %v112 = vld [vmem:[%s2 + $0x88] sm:$0xff]
    %v113 = vld [vmem:[%s2 + $0x90] sm:$0xff]
    %v114 = vld [vmem:[%s2 + $0x98] sm:$0xff]
    %v115 = vld [vmem:[%s2 + $0xa0] sm:$0xff]
    %v116 = vld [vmem:[%s2 + $0xa8] sm:$0xff]
    %v117 = vld [vmem:[%s2 + $0xb0] sm:$0xff]
    %v118 = vld [vmem:[%s2 + $0xb8] sm:$0xff]
    %v119 = vld [vmem:[%s2 + $0xc0] sm:$0xff]
    %v120 = vld [vmem:[%s2 + $0xc8] sm:$0xff]
    %v121 = vld [vmem:[%s2 + $0xd0] sm:$0xff]
    %v122 = vld [vmem:[%s2 + $0xd8] sm:$0xff]
    %v123 = vld [vmem:[%s2 + $0xe0] sm:$0xff]
    %v124 = vld [vmem:[%s2 + $0xe8] sm:$0xff]
    %v125 = vld [vmem:[%s2 + $0xf0] sm:$0xff]
    %v126 = vld [vmem:[%s2 + $0xf8] sm:$0xff]
    %v127 = vld [vmem:[%s2 + $0x100] sm:$0xff]
    %v128 = vld [vmem:[%s2 + $0x108] sm:$0xff]
    %v129 = vld [vmem:[%s2 + $0x110] sm:$0xff]
    %v130 = vld [vmem:[%s2 + $0x118] sm:$0xff]
    %v131 = vld [vmem:[%s2 + $0x120] sm:$0xff]
    %v132 = vld [vmem:[%s2 + $0x128] sm:$0xff]
    %v133 = vld [vmem:[%s2 + $0x130] sm:$0xff]
    %v134 = vld [vmem:[%s2 + $0x138] sm:$0xff]
    %v135 = vld [vmem:[%s2 + $0x140] sm:$0xff]
    %v136 = vld [vmem:[%s2 + $0x148] sm:$0xff]
    %v137 = vld [vmem:[%s2 + $0x150] sm:$0xff]
    %v138 = vld [vmem:[%s2 + $0x158] sm:$0xff]
    %v139 = vld [vmem:[%s2 + $0x160] sm:$0xff]
    %v140 = vld [vmem:[%s2 + $0x168] sm:$0xff]
    %v141 = vld [vmem:[%s2 + $0x170] sm:$0xff]
    %v142 = vld [vmem:[%s2 + $0x178] sm:$0xff]
    %v143 = vld [vmem:[%s2 + $0x180] sm:$0xff]
    %v144 = vld [vmem:[%s2 + $0x188] sm:$0xff]
    %v145 = vld [vmem:[%s2 + $0x190] sm:$0xff]
    %v146 = vld [vmem:[%s2 + $0x198] sm:$0xff]
    %v147 = vld [vmem:[%s2 + $0x1a0] sm:$0xff]
    %v148 = vld [vmem:[%s2 + $0x1a8] sm:$0xff]
    %v149 = vld [vmem:[%s2 + $0x1b0] sm:$0xff]
    %v150 = vld [vmem:[%s2 + $0x1b8] sm:$0xff]
    %v151 = vld [vmem:[%s2 + $0x1c0] sm:$0xff]
    %v152 = vld [vmem:[%s2 + $0x1c8] sm:$0xff]
    %v153 = vld [vmem:[%s2 + $0x1d0] sm:$0xff]
    %v154 = vld [vmem:[%s2 + $0x1d8] sm:$0xff]
    %v155 = vld [vmem:[%s2 + $0x1e0] sm:$0xff]
    %v156 = vld [vmem:[%s2 + $0x1e8] sm:$0xff]
    %v157 = vld [vmem:[%s2 + $0x1f0] sm:$0xff]
    %v158 = vld [vmem:[%s2 + $0x1f8] sm:$0xff]
    %160 = vset.pattern.permute.xlu0 0
    %161 = vperm.xlu0 %160, %v95
    %v162 = vpop.permute.xlu0 %161
    %165 = vset.pattern.permute.xlu0 0
    %166 = vperm.xlu0 %165, %v96
    %v167 = vpop.permute.xlu0 %166
    %170 = vset.pattern.permute.xlu0 0
    %171 = vperm.xlu0 %170, %v97
    %v172 = vpop.permute.xlu0 %171
    %175 = vset.pattern.permute.xlu0 0
    %176 = vperm.xlu0 %175, %v98
    %v177 = vpop.permute.xlu0 %176
    %180 = vset.pattern.permute.xlu0 0
    %181 = vperm.xlu0 %180, %v99
    %v182 = vpop.permute.xlu0 %181
    %185 = vset.pattern.permute.xlu0 0
    %186 = vperm.xlu0 %185, %v100
    %v187 = vpop.permute.xlu0 %186
    %190 = vset.pattern.permute.xlu0 0
    %191 = vperm.xlu0 %190, %v101
    %v192 = vpop.permute.xlu0 %191
    %195 = vset.pattern.permute.xlu0 0
    %196 = vperm.xlu0 %195, %v102
    %v197 = vpop.permute.xlu0 %196
    %200 = vset.pattern.permute.xlu0 0
    %201 = vperm.xlu0 %200, %v103
    %v202 = vpop.permute.xlu0 %201
    %205 = vset.pattern.permute.xlu0 0
    %206 = vperm.xlu0 %205, %v104
    %v207 = vpop.permute.xlu0 %206
    %210 = vset.pattern.permute.xlu0 0
    %211 = vperm.xlu0 %210, %v105
    %v212 = vpop.permute.xlu0 %211
    %215 = vset.pattern.permute.xlu0 0
    %216 = vperm.xlu0 %215, %v106
    %v217 = vpop.permute.xlu0 %216
    %220 = vset.pattern.permute.xlu0 0
    %221 = vperm.xlu0 %220, %v107
    %v222 = vpop.permute.xlu0 %221
    %225 = vset.pattern.permute.xlu0 0
    %226 = vperm.xlu0 %225, %v108
    %v227 = vpop.permute.xlu0 %226
    %230 = vset.pattern.permute.xlu0 0
    %231 = vperm.xlu0 %230, %v109
    %v232 = vpop.permute.xlu0 %231
    %235 = vset.pattern.permute.xlu0 0
    %236 = vperm.xlu0 %235, %v110
    %v237 = vpop.permute.xlu0 %236
    %240 = vset.pattern.permute.xlu0 0
    %241 = vperm.xlu0 %240, %v111
    %v242 = vpop.permute.xlu0 %241
    %245 = vset.pattern.permute.xlu0 0
    %246 = vperm.xlu0 %245, %v112
    %v247 = vpop.permute.xlu0 %246
    %250 = vset.pattern.permute.xlu0 0
    %251 = vperm.xlu0 %250, %v113
    %v252 = vpop.permute.xlu0 %251
    %255 = vset.pattern.permute.xlu0 0
    %256 = vperm.xlu0 %255, %v114
    %v257 = vpop.permute.xlu0 %256
    %260 = vset.pattern.permute.xlu0 0
    %261 = vperm.xlu0 %260, %v115
    %v262 = vpop.permute.xlu0 %261
    %265 = vset.pattern.permute.xlu0 0
    %266 = vperm.xlu0 %265, %v116
    %v267 = vpop.permute.xlu0 %266
    %270 = vset.pattern.permute.xlu0 0
    %271 = vperm.xlu0 %270, %v117
    %v272 = vpop.permute.xlu0 %271
    %275 = vset.pattern.permute.xlu0 0
    %276 = vperm.xlu0 %275, %v118
    %v277 = vpop.permute.xlu0 %276
    %280 = vset.pattern.permute.xlu0 0
    %281 = vperm.xlu0 %280, %v119
    %v282 = vpop.permute.xlu0 %281
    %285 = vset.pattern.permute.xlu0 0
    %286 = vperm.xlu0 %285, %v120
    %v287 = vpop.permute.xlu0 %286
    %290 = vset.pattern.permute.xlu0 0
    %291 = vperm.xlu0 %290, %v121
    %v292 = vpop.permute.xlu0 %291
    %295 = vset.pattern.permute.xlu0 0
    %296 = vperm.xlu0 %295, %v122
    %v297 = vpop.permute.xlu0 %296
    %300 = vset.pattern.permute.xlu0 0
    %301 = vperm.xlu0 %300, %v123
    %v302 = vpop.permute.xlu0 %301
    %305 = vset.pattern.permute.xlu0 0
    %306 = vperm.xlu0 %305, %v124
    %v307 = vpop.permute.xlu0 %306
    %310 = vset.pattern.permute.xlu0 0
    %311 = vperm.xlu0 %310, %v125
    %v312 = vpop.permute.xlu0 %311
    %315 = vset.pattern.permute.xlu0 0
    %316 = vperm.xlu0 %315, %v126
    %v317 = vpop.permute.xlu0 %316
    %320 = vset.pattern.permute.xlu0 0
    %321 = vperm.xlu0 %320, %v127
    %v322 = vpop.permute.xlu0 %321
    %325 = vset.pattern.permute.xlu0 0
    %326 = vperm.xlu0 %325, %v128
    %v327 = vpop.permute.xlu0 %326
    %330 = vset.pattern.permute.xlu0 0
    %331 = vperm.xlu0 %330, %v129
    %v332 = vpop.permute.xlu0 %331
    %335 = vset.pattern.permute.xlu0 0
    %336 = vperm.xlu0 %335, %v130
    %v337 = vpop.permute.xlu0 %336
    %340 = vset.pattern.permute.xlu0 0
    %341 = vperm.xlu0 %340, %v131
    %v342 = vpop.permute.xlu0 %341
    %345 = vset.pattern.permute.xlu0 0
    %346 = vperm.xlu0 %345, %v132
    %v347 = vpop.permute.xlu0 %346
    %350 = vset.pattern.permute.xlu0 0
    %351 = vperm.xlu0 %350, %v133
    %v352 = vpop.permute.xlu0 %351
    %355 = vset.pattern.permute.xlu0 0
    %356 = vperm.xlu0 %355, %v134
    %v357 = vpop.permute.xlu0 %356
    %360 = vset.pattern.permute.xlu0 0
    %361 = vperm.xlu0 %360, %v135
    %v362 = vpop.permute.xlu0 %361
    %365 = vset.pattern.permute.xlu0 0
    %366 = vperm.xlu0 %365, %v136
    %v367 = vpop.permute.xlu0 %366
    %370 = vset.pattern.permute.xlu0 0
    %371 = vperm.xlu0 %370, %v137
    %v372 = vpop.permute.xlu0 %371
    %375 = vset.pattern.permute.xlu0 0
    %376 = vperm.xlu0 %375, %v138
    %v377 = vpop.permute.xlu0 %376
    %380 = vset.pattern.permute.xlu0 0
    %381 = vperm.xlu0 %380, %v139
    %v382 = vpop.permute.xlu0 %381
    %385 = vset.pattern.permute.xlu0 0
    %386 = vperm.xlu0 %385, %v140
    %v387 = vpop.permute.xlu0 %386
    %390 = vset.pattern.permute.xlu0 0
    %391 = vperm.xlu0 %390, %v141
    %v392 = vpop.permute.xlu0 %391
    %395 = vset.pattern.permute.xlu0 0
    %396 = vperm.xlu0 %395, %v142
    %v397 = vpop.permute.xlu0 %396
    %400 = vset.pattern.permute.xlu0 0
    %401 = vperm.xlu0 %400, %v143
    %v402 = vpop.permute.xlu0 %401
    %405 = vset.pattern.permute.xlu0 0
    %406 = vperm.xlu0 %405, %v144
    %v407 = vpop.permute.xlu0 %406
    %410 = vset.pattern.permute.xlu0 0
    %411 = vperm.xlu0 %410, %v145
    %v412 = vpop.permute.xlu0 %411
    %415 = vset.pattern.permute.xlu0 0
    %416 = vperm.xlu0 %415, %v146
    %v417 = vpop.permute.xlu0 %416
    %420 = vset.pattern.permute.xlu0 0
    %421 = vperm.xlu0 %420, %v147
    %v422 = vpop.permute.xlu0 %421
    %425 = vset.pattern.permute.xlu0 0
    %426 = vperm.xlu0 %425, %v148
    %v427 = vpop.permute.xlu0 %426
    %430 = vset.pattern.permute.xlu0 0
    %431 = vperm.xlu0 %430, %v149
    %v432 = vpop.permute.xlu0 %431
    %435 = vset.pattern.permute.xlu0 0
    %436 = vperm.xlu0 %435, %v150
    %v437 = vpop.permute.xlu0 %436
    %440 = vset.pattern.permute.xlu0 0
    %441 = vperm.xlu0 %440, %v151
    %v442 = vpop.permute.xlu0 %441
    %445 = vset.pattern.permute.xlu0 0
    %446 = vperm.xlu0 %445, %v152
    %v447 = vpop.permute.xlu0 %446
    %450 = vset.pattern.permute.xlu0 0
    %451 = vperm.xlu0 %450, %v153
    %v452 = vpop.permute.xlu0 %451
    %455 = vset.pattern.permute.xlu0 0
    %456 = vperm.xlu0 %455, %v154
    %v457 = vpop.permute.xlu0 %456
    %460 = vset.pattern.permute.xlu0 0
    %461 = vperm.xlu0 %460, %v155
    %v462 = vpop.permute.xlu0 %461
    %465 = vset.pattern.permute.xlu0 0
    %466 = vperm.xlu0 %465, %v156
    %v467 = vpop.permute.xlu0 %466
    %470 = vset.pattern.permute.xlu0 0
    %471 = vperm.xlu0 %470, %v157
    %v472 = vpop.permute.xlu0 %471
    %475 = vset.pattern.permute.xlu0 0
    %476 = vperm.xlu0 %475, %v158
    %v477 = vpop.permute.xlu0 %476
    %v543 = vunpack.c.l.b16 %v31
    %v544 = vunpack.c.l.b16 %v32
    %v545 = vunpack.c.l.b16 %v33
    %v546 = vunpack.c.l.b16 %v34
    %v547 = vunpack.c.l.b16 %v35
    %v548 = vunpack.c.l.b16 %v36
    %v549 = vunpack.c.l.b16 %v37
    %v550 = vunpack.c.l.b16 %v38
    %v551 = vunpack.c.l.b16 %v39
    %v552 = vunpack.c.l.b16 %v40
    %v553 = vunpack.c.l.b16 %v41
    %v554 = vunpack.c.l.b16 %v42
    %v555 = vunpack.c.l.b16 %v43
    %v556 = vunpack.c.l.b16 %v44
    %v557 = vunpack.c.l.b16 %v45
    %v558 = vunpack.c.l.b16 %v46
    %v559 = vunpack.c.l.b16 %v47
    %v560 = vunpack.c.l.b16 %v48
    %v561 = vunpack.c.l.b16 %v49
    %v562 = vunpack.c.l.b16 %v50
    %v563 = vunpack.c.l.b16 %v51
    %v564 = vunpack.c.l.b16 %v52
    %v565 = vunpack.c.l.b16 %v53
    %v566 = vunpack.c.l.b16 %v54
    %v567 = vunpack.c.l.b16 %v55
    %v568 = vunpack.c.l.b16 %v56
    %v569 = vunpack.c.l.b16 %v57
    %v570 = vunpack.c.l.b16 %v58
    %v571 = vunpack.c.l.b16 %v59
    %v572 = vunpack.c.l.b16 %v60
    %v573 = vunpack.c.l.b16 %v61
    %v574 = vunpack.c.l.b16 %v62
    %v575 = vunpack.c.l.b16 %v63
    %v576 = vunpack.c.l.b16 %v64
    %v577 = vunpack.c.l.b16 %v65
    %v578 = vunpack.c.l.b16 %v66
    %v579 = vunpack.c.l.b16 %v67
    %v580 = vunpack.c.l.b16 %v68
    %v581 = vunpack.c.l.b16 %v69
    %v582 = vunpack.c.l.b16 %v70
    %v583 = vunpack.c.l.b16 %v71
    %v584 = vunpack.c.l.b16 %v72
    %v585 = vunpack.c.l.b16 %v73
    %v586 = vunpack.c.l.b16 %v74
    %v587 = vunpack.c.l.b16 %v75
    %v588 = vunpack.c.l.b16 %v76
    %v589 = vunpack.c.l.b16 %v77
    %v590 = vunpack.c.l.b16 %v78
    %v591 = vunpack.c.l.b16 %v79
    %v592 = vunpack.c.l.b16 %v80
    %v593 = vunpack.c.l.b16 %v81
    %v594 = vunpack.c.l.b16 %v82
    %v595 = vunpack.c.l.b16 %v83
    %v596 = vunpack.c.l.b16 %v84
    %v597 = vunpack.c.l.b16 %v85
    %v598 = vunpack.c.l.b16 %v86
    %v599 = vunpack.c.l.b16 %v87
    %v600 = vunpack.c.l.b16 %v88
    %v601 = vunpack.c.l.b16 %v89
    %v602 = vunpack.c.l.b16 %v90
    %v603 = vunpack.c.l.b16 %v91
    %v604 = vunpack.c.l.b16 %v92
    %v605 = vunpack.c.l.b16 %v93
    %v606 = vunpack.c.l.b16 %v94
    %v607 = vpack.c.b16 %v544, %v543
    %v608 = vpack.c.b16 %v546, %v545
    %v609 = vpack.c.b16 %v548, %v547
    %v610 = vpack.c.b16 %v550, %v549
    %v611 = vpack.c.b16 %v552, %v551
    %v612 = vpack.c.b16 %v554, %v553
    %v613 = vpack.c.b16 %v556, %v555
    %v614 = vpack.c.b16 %v558, %v557
    %v615 = vpack.c.b16 %v560, %v559
    %v616 = vpack.c.b16 %v562, %v561
    %v617 = vpack.c.b16 %v564, %v563
    %v618 = vpack.c.b16 %v566, %v565
    %v619 = vpack.c.b16 %v568, %v567
    %v620 = vpack.c.b16 %v570, %v569
    %v621 = vpack.c.b16 %v572, %v571
    %v622 = vpack.c.b16 %v574, %v573
    %v623 = vpack.c.b16 %v576, %v575
    %v624 = vpack.c.b16 %v578, %v577
    %v625 = vpack.c.b16 %v580, %v579
    %v626 = vpack.c.b16 %v582, %v581
    %v627 = vpack.c.b16 %v584, %v583
    %v628 = vpack.c.b16 %v586, %v585
    %v629 = vpack.c.b16 %v588, %v587
    %v630 = vpack.c.b16 %v590, %v589
    %v631 = vpack.c.b16 %v592, %v591
    %v632 = vpack.c.b16 %v594, %v593
    %v633 = vpack.c.b16 %v596, %v595
    %v634 = vpack.c.b16 %v598, %v597
    %v635 = vpack.c.b16 %v600, %v599
    %v636 = vpack.c.b16 %v602, %v601
    %v637 = vpack.c.b16 %v604, %v603
    %v638 = vpack.c.b16 %v606, %v605
    %vm639 = vcmask 64512
    %v641 = vsel %vm639, %v607, 0
    %v644 = vsel %vm639, %v608, 0
    %v647 = vsel %vm639, %v609, 0
    %v650 = vsel %vm639, %v610, 0
    %v653 = vsel %vm639, %v611, 0
    %v656 = vsel %vm639, %v612, 0
    %v659 = vsel %vm639, %v613, 0
    %v662 = vsel %vm639, %v614, 0
    %v665 = vsel %vm639, %v615, 0
    %v668 = vsel %vm639, %v616, 0
    %v671 = vsel %vm639, %v617, 0
    %v674 = vsel %vm639, %v618, 0
    %v677 = vsel %vm639, %v619, 0
    %v680 = vsel %vm639, %v620, 0
    %v683 = vsel %vm639, %v621, 0
    %v686 = vsel %vm639, %v622, 0
    %v689 = vsel %vm639, %v623, 0
    %v692 = vsel %vm639, %v624, 0
    %v695 = vsel %vm639, %v625, 0
    %v698 = vsel %vm639, %v626, 0
    %v701 = vsel %vm639, %v627, 0
    %v704 = vsel %vm639, %v628, 0
    %v707 = vsel %vm639, %v629, 0
    %v710 = vsel %vm639, %v630, 0
    %v713 = vsel %vm639, %v631, 0
    %v716 = vsel %vm639, %v632, 0
    %v719 = vsel %vm639, %v633, 0
    %v722 = vsel %vm639, %v634, 0
    %v725 = vsel %vm639, %v635, 0
    %v728 = vsel %vm639, %v636, 0
    %v731 = vsel %vm639, %v637, 0
    %v734 = vsel %vm639, %v638, 0
    %vm736 = vcmask 1043456
    %v738 = vsel %vm736, %v30, 0
    %740 = vmatprep.subr.bf16.mxu0 0
    %741 = vmatpush1.bf16.msra.mxu0 0
    %742 = vmatprep.subr.bf16.mxu0 0
    %743 = vmatpush1.bf16.msra.mxu0 0
    %744 = vmatprep.subr.bf16.mxu0 0
    %745 = vmatpush1.bf16.msra.mxu0 0
    %746 = vmatprep.subr.bf16.mxu0 0
    %747 = vmatpush1.bf16.msra.mxu0 0
    %748 = vmatprep.subr.bf16.mxu0 0
    %749 = vmatpush1.bf16.msra.mxu0 0
    %750 = vmatprep.subr.bf16.mxu0 0
    %751 = vmatpush1.bf16.msra.mxu0 0
    %752 = vmatprep.subr.bf16.mxu0 0
    %753 = vmatpush1.bf16.msra.mxu0 0
    %754 = vmatprep.subr.bf16.mxu0 0
    %755 = vmatpush1.bf16.msra.mxu0 %v738
    %756 = vmatprep.subr.bf16.mxu0 0
    %757 = vmatpush2.bf16.msra.mxu0 0
    %758 = vmatprep.subr.bf16.mxu0 0
    %759 = vmatpush2.bf16.msra.mxu0 0
    %760 = vmatprep.subr.bf16.mxu0 0
    %761 = vmatpush2.bf16.msra.mxu0 0
    %762 = vmatprep.subr.bf16.mxu0 0
    %763 = vmatpush2.bf16.msra.mxu0 0
    %764 = vmatprep.subr.bf16.mxu0 0
    %765 = vmatpush2.bf16.msra.mxu0 0
    %766 = vmatprep.subr.bf16.mxu0 0
    %767 = vmatpush2.bf16.msra.mxu0 0
    %768 = vmatprep.subr.bf16.mxu0 0
    %769 = vmatpush2.bf16.msra.mxu0 0
    %770 = vmatprep.subr.bf16.mxu0 0
    %771 = vmatpush2.bf16.msra.mxu0 0
    %772 = vmatprep.mubr.bf16.mxu0 0
    %773 = vmatmul.mubr.bf16.gmra.mxu0 %v641
    %v774 = vpop.f32.mrf.mxu0
    %v775 = vadd.f32 %v162, %v774
    %v776 = vpop.f32.mrf.mxu0
    %v777 = vpop.f32.mrf.mxu0
    %v778 = vadd.f32 %v167, %v777
    %v779 = vpop.f32.mrf.mxu0
    %780 = vmatprep.mubr.bf16.mxu0 0
    %781 = vmatmul.mubr.bf16.gmra.mxu0 %v644
    %v782 = vpop.f32.mrf.mxu0
    %v783 = vadd.f32 %v172, %v782
    %v784 = vpop.f32.mrf.mxu0
    %v785 = vpop.f32.mrf.mxu0
    %v786 = vadd.f32 %v177, %v785
    %v787 = vpop.f32.mrf.mxu0
    %788 = vmatprep.mubr.bf16.mxu0 0
    %789 = vmatmul.mubr.bf16.gmra.mxu0 %v647
    %v790 = vpop.f32.mrf.mxu0
    %v791 = vadd.f32 %v182, %v790
    %v792 = vpop.f32.mrf.mxu0
    %v793 = vpop.f32.mrf.mxu0
    %v794 = vadd.f32 %v187, %v793
    %v795 = vpop.f32.mrf.mxu0
    %796 = vmatprep.mubr.bf16.mxu0 0
    %797 = vmatmul.mubr.bf16.gmra.mxu0 %v650
    %v798 = vpop.f32.mrf.mxu0
    %v799 = vadd.f32 %v192, %v798
    %v800 = vpop.f32.mrf.mxu0
    %v801 = vpop.f32.mrf.mxu0
    %v802 = vadd.f32 %v197, %v801
    %v803 = vpop.f32.mrf.mxu0
    %804 = vmatprep.mubr.bf16.mxu0 0
    %805 = vmatmul.mubr.bf16.gmra.mxu0 %v653
    %v806 = vpop.f32.mrf.mxu0
    %v807 = vadd.f32 %v202, %v806
    %v808 = vpop.f32.mrf.mxu0
    %v809 = vpop.f32.mrf.mxu0
    %v810 = vadd.f32 %v207, %v809
    %v811 = vpop.f32.mrf.mxu0
    %812 = vmatprep.mubr.bf16.mxu0 0
    %813 = vmatmul.mubr.bf16.gmra.mxu0 %v656
    %v814 = vpop.f32.mrf.mxu0
    %v815 = vadd.f32 %v212, %v814
    %v816 = vpop.f32.mrf.mxu0
    %v817 = vpop.f32.mrf.mxu0
    %v818 = vadd.f32 %v217, %v817
    %v819 = vpop.f32.mrf.mxu0
    %820 = vmatprep.mubr.bf16.mxu0 0
    %821 = vmatmul.mubr.bf16.gmra.mxu0 %v659
    %v822 = vpop.f32.mrf.mxu0
    %v823 = vadd.f32 %v222, %v822
    %v824 = vpop.f32.mrf.mxu0
    %v825 = vpop.f32.mrf.mxu0
    %v826 = vadd.f32 %v227, %v825
    %v827 = vpop.f32.mrf.mxu0
    %828 = vmatprep.mubr.bf16.mxu0 0
    %829 = vmatmul.mubr.bf16.gmra.mxu0 %v662
    %v830 = vpop.f32.mrf.mxu0
    %v831 = vadd.f32 %v232, %v830
    %v832 = vpop.f32.mrf.mxu0
    %v833 = vpop.f32.mrf.mxu0
    %v834 = vadd.f32 %v237, %v833
    %v835 = vpop.f32.mrf.mxu0
    %836 = vmatprep.mubr.bf16.mxu0 0
    %837 = vmatmul.mubr.bf16.gmra.mxu0 %v665
    %v838 = vpop.f32.mrf.mxu0
    %v839 = vadd.f32 %v242, %v838
    %v840 = vpop.f32.mrf.mxu0
    %v841 = vpop.f32.mrf.mxu0
    %v842 = vadd.f32 %v247, %v841
    %v843 = vpop.f32.mrf.mxu0
    %844 = vmatprep.mubr.bf16.mxu0 0
    %845 = vmatmul.mubr.bf16.gmra.mxu0 %v668
    %v846 = vpop.f32.mrf.mxu0
    %v847 = vadd.f32 %v252, %v846
    %v848 = vpop.f32.mrf.mxu0
    %v849 = vpop.f32.mrf.mxu0
    %v850 = vadd.f32 %v257, %v849
    %v851 = vpop.f32.mrf.mxu0
    %852 = vmatprep.mubr.bf16.mxu0 0
    %853 = vmatmul.mubr.bf16.gmra.mxu0 %v671
    %v854 = vpop.f32.mrf.mxu0
    %v855 = vadd.f32 %v262, %v854
    %v856 = vpop.f32.mrf.mxu0
    %v857 = vpop.f32.mrf.mxu0
    %v858 = vadd.f32 %v267, %v857
    %v859 = vpop.f32.mrf.mxu0
    %860 = vmatprep.mubr.bf16.mxu0 0
    %861 = vmatmul.mubr.bf16.gmra.mxu0 %v674
    %v862 = vpop.f32.mrf.mxu0
    %v863 = vadd.f32 %v272, %v862
    %v864 = vpop.f32.mrf.mxu0
    %v865 = vpop.f32.mrf.mxu0
    %v866 = vadd.f32 %v277, %v865
    %v867 = vpop.f32.mrf.mxu0
    %868 = vmatprep.mubr.bf16.mxu0 0
    %869 = vmatmul.mubr.bf16.gmra.mxu0 %v677
    %v870 = vpop.f32.mrf.mxu0
    %v871 = vadd.f32 %v282, %v870
    %v872 = vpop.f32.mrf.mxu0
    %v873 = vpop.f32.mrf.mxu0
    %v874 = vadd.f32 %v287, %v873
    %v875 = vpop.f32.mrf.mxu0
    %876 = vmatprep.mubr.bf16.mxu0 0
    %877 = vmatmul.mubr.bf16.gmra.mxu0 %v680
    %v878 = vpop.f32.mrf.mxu0
    %v879 = vadd.f32 %v292, %v878
    %v880 = vpop.f32.mrf.mxu0
    %v881 = vpop.f32.mrf.mxu0
    %v882 = vadd.f32 %v297, %v881
    %v883 = vpop.f32.mrf.mxu0
    %884 = vmatprep.mubr.bf16.mxu0 0
    %885 = vmatmul.mubr.bf16.gmra.mxu0 %v683
    %v886 = vpop.f32.mrf.mxu0
    %v887 = vadd.f32 %v302, %v886
    %v888 = vpop.f32.mrf.mxu0
    %v889 = vpop.f32.mrf.mxu0
    %v890 = vadd.f32 %v307, %v889
    %v891 = vpop.f32.mrf.mxu0
    %892 = vmatprep.mubr.bf16.mxu0 0
    %893 = vmatmul.mubr.bf16.gmra.mxu0 %v686
    %v894 = vpop.f32.mrf.mxu0
    %v895 = vadd.f32 %v312, %v894
    %v896 = vpop.f32.mrf.mxu0
    %v897 = vpop.f32.mrf.mxu0
    %v898 = vadd.f32 %v317, %v897
    %v899 = vpop.f32.mrf.mxu0
    %900 = vmatprep.mubr.bf16.mxu0 0
    %901 = vmatmul.mubr.bf16.gmra.mxu0 %v689
    %v902 = vpop.f32.mrf.mxu0
    %v903 = vadd.f32 %v322, %v902
    %v904 = vpop.f32.mrf.mxu0
    %v905 = vpop.f32.mrf.mxu0
    %v906 = vadd.f32 %v327, %v905
    %v907 = vpop.f32.mrf.mxu0
    %908 = vmatprep.mubr.bf16.mxu0 0
    %909 = vmatmul.mubr.bf16.gmra.mxu0 %v692
    %v910 = vpop.f32.mrf.mxu0
    %v911 = vadd.f32 %v332, %v910
    %v912 = vpop.f32.mrf.mxu0
    %v913 = vpop.f32.mrf.mxu0
    %v914 = vadd.f32 %v337, %v913
    %v915 = vpop.f32.mrf.mxu0
    %916 = vmatprep.mubr.bf16.mxu0 0
    %917 = vmatmul.mubr.bf16.gmra.mxu0 %v695
    %v918 = vpop.f32.mrf.mxu0
    %v919 = vadd.f32 %v342, %v918
    %v920 = vpop.f32.mrf.mxu0
    %v921 = vpop.f32.mrf.mxu0
    %v922 = vadd.f32 %v347, %v921
    %v923 = vpop.f32.mrf.mxu0
    %924 = vmatprep.mubr.bf16.mxu0 0
    %925 = vmatmul.mubr.bf16.gmra.mxu0 %v698
    %v926 = vpop.f32.mrf.mxu0
    %v927 = vadd.f32 %v352, %v926
    %v928 = vpop.f32.mrf.mxu0
    %v929 = vpop.f32.mrf.mxu0
    %v930 = vadd.f32 %v357, %v929
    %v931 = vpop.f32.mrf.mxu0
    %932 = vmatprep.mubr.bf16.mxu0 0
    %933 = vmatmul.mubr.bf16.gmra.mxu0 %v701
    %v934 = vpop.f32.mrf.mxu0
    %v935 = vadd.f32 %v362, %v934
    %v936 = vpop.f32.mrf.mxu0
    %v937 = vpop.f32.mrf.mxu0
    %v938 = vadd.f32 %v367, %v937
    %v939 = vpop.f32.mrf.mxu0
    %940 = vmatprep.mubr.bf16.mxu0 0
    %941 = vmatmul.mubr.bf16.gmra.mxu0 %v704
    %v942 = vpop.f32.mrf.mxu0
    %v943 = vadd.f32 %v372, %v942
    %v944 = vpop.f32.mrf.mxu0
    %v945 = vpop.f32.mrf.mxu0
    %v946 = vadd.f32 %v377, %v945
    %v947 = vpop.f32.mrf.mxu0
    %948 = vmatprep.mubr.bf16.mxu0 0
    %949 = vmatmul.mubr.bf16.gmra.mxu0 %v707
    %v950 = vpop.f32.mrf.mxu0
    %v951 = vadd.f32 %v382, %v950
    %v952 = vpop.f32.mrf.mxu0
    %v953 = vpop.f32.mrf.mxu0
    %v954 = vadd.f32 %v387, %v953
    %v955 = vpop.f32.mrf.mxu0
    %956 = vmatprep.mubr.bf16.mxu0 0
    %957 = vmatmul.mubr.bf16.gmra.mxu0 %v710
    %v958 = vpop.f32.mrf.mxu0
    %v959 = vadd.f32 %v392, %v958
    %v960 = vpop.f32.mrf.mxu0
    %v961 = vpop.f32.mrf.mxu0
    %v962 = vadd.f32 %v397, %v961
    %v963 = vpop.f32.mrf.mxu0
    %964 = vmatprep.mubr.bf16.mxu0 0
    %965 = vmatmul.mubr.bf16.gmra.mxu0 %v713
    %v966 = vpop.f32.mrf.mxu0
    %v967 = vadd.f32 %v402, %v966
    %v968 = vpop.f32.mrf.mxu0
    %v969 = vpop.f32.mrf.mxu0
    %v970 = vadd.f32 %v407, %v969
    %v971 = vpop.f32.mrf.mxu0
    %972 = vmatprep.mubr.bf16.mxu0 0
    %973 = vmatmul.mubr.bf16.gmra.mxu0 %v716
    %v974 = vpop.f32.mrf.mxu0
    %v975 = vadd.f32 %v412, %v974
    %v976 = vpop.f32.mrf.mxu0
    %v977 = vpop.f32.mrf.mxu0
    %v978 = vadd.f32 %v417, %v977
    %v979 = vpop.f32.mrf.mxu0
    %980 = vmatprep.mubr.bf16.mxu0 0
    %981 = vmatmul.mubr.bf16.gmra.mxu0 %v719
    %v982 = vpop.f32.mrf.mxu0
    %v983 = vadd.f32 %v422, %v982
    %v984 = vpop.f32.mrf.mxu0
    %v985 = vpop.f32.mrf.mxu0
    %v986 = vadd.f32 %v427, %v985
    %v987 = vpop.f32.mrf.mxu0
    %988 = vmatprep.mubr.bf16.mxu0 0
    %989 = vmatmul.mubr.bf16.gmra.mxu0 %v722
    %v990 = vpop.f32.mrf.mxu0
    %v991 = vadd.f32 %v432, %v990
    %v992 = vpop.f32.mrf.mxu0
    %v993 = vpop.f32.mrf.mxu0
    %v994 = vadd.f32 %v437, %v993
    %v995 = vpop.f32.mrf.mxu0
    %996 = vmatprep.mubr.bf16.mxu0 0
    %997 = vmatmul.mubr.bf16.gmra.mxu0 %v725
    %v998 = vpop.f32.mrf.mxu0
    %v999 = vadd.f32 %v442, %v998
    %v1000 = vpop.f32.mrf.mxu0
    %v1001 = vpop.f32.mrf.mxu0
    %v1002 = vadd.f32 %v447, %v1001
    %v1003 = vpop.f32.mrf.mxu0
    %1004 = vmatprep.mubr.bf16.mxu0 0
    %1005 = vmatmul.mubr.bf16.gmra.mxu0 %v728
    %v1006 = vpop.f32.mrf.mxu0
    %v1007 = vadd.f32 %v452, %v1006
    %v1008 = vpop.f32.mrf.mxu0
    %v1009 = vpop.f32.mrf.mxu0
    %v1010 = vadd.f32 %v457, %v1009
    %v1011 = vpop.f32.mrf.mxu0
    %1012 = vmatprep.mubr.bf16.mxu0 0
    %1013 = vmatmul.mubr.bf16.gmra.mxu0 %v731
    %v1014 = vpop.f32.mrf.mxu0
    %v1015 = vadd.f32 %v462, %v1014
    %v1016 = vpop.f32.mrf.mxu0
    %v1017 = vpop.f32.mrf.mxu0
    %v1018 = vadd.f32 %v467, %v1017
    %v1019 = vpop.f32.mrf.mxu0
    %1020 = vmatprep.mubr.bf16.mxu0 0
    %1021 = vmatmul.mubr.bf16.gmra.mxu0 %v734
    %v1022 = vpop.f32.mrf.mxu0
    %v1023 = vadd.f32 %v472, %v1022
    %v1024 = vpop.f32.mrf.mxu0
    %v1025 = vpop.f32.mrf.mxu0
    %v1026 = vadd.f32 %v477, %v1025
    %v1027 = vpop.f32.mrf.mxu0
    %1028 = vdwg.mxu0
    %v1029 = vmax.f32 %v775, 0.0
    %v1030 = vmax.f32 %v778, 0.0
    %v1031 = vmax.f32 %v783, 0.0
    %v1032 = vmax.f32 %v786, 0.0
    %v1033 = vmax.f32 %v791, 0.0
    %v1034 = vmax.f32 %v794, 0.0
    %v1035 = vmax.f32 %v799, 0.0
    %v1036 = vmax.f32 %v802, 0.0
    %v1037 = vmax.f32 %v807, 0.0
    %v1038 = vmax.f32 %v810, 0.0
    %v1039 = vmax.f32 %v815, 0.0
    %v1040 = vmax.f32 %v818, 0.0
    %v1041 = vmax.f32 %v823, 0.0
    %v1042 = vmax.f32 %v826, 0.0
    %v1043 = vmax.f32 %v831, 0.0
    %v1044 = vmax.f32 %v834, 0.0
    %v1045 = vmax.f32 %v839, 0.0
    %v1046 = vmax.f32 %v842, 0.0
    %v1047 = vmax.f32 %v847, 0.0
    %v1048 = vmax.f32 %v850, 0.0
    %v1049 = vmax.f32 %v855, 0.0
    %v1050 = vmax.f32 %v858, 0.0
    %v1051 = vmax.f32 %v863, 0.0
    %v1052 = vmax.f32 %v866, 0.0
    %v1053 = vmax.f32 %v871, 0.0
    %v1054 = vmax.f32 %v874, 0.0
    %v1055 = vmax.f32 %v879, 0.0
    %v1056 = vmax.f32 %v882, 0.0
    %v1057 = vmax.f32 %v887, 0.0
    %v1058 = vmax.f32 %v890, 0.0
    %v1059 = vmax.f32 %v895, 0.0
    %v1060 = vmax.f32 %v898, 0.0
    %v1061 = vmax.f32 %v903, 0.0
    %v1062 = vmax.f32 %v906, 0.0
    %v1063 = vmax.f32 %v911, 0.0
    %v1064 = vmax.f32 %v914, 0.0
    %v1065 = vmax.f32 %v919, 0.0
    %v1066 = vmax.f32 %v922, 0.0
    %v1067 = vmax.f32 %v927, 0.0
    %v1068 = vmax.f32 %v930, 0.0
    %v1069 = vmax.f32 %v935, 0.0
    %v1070 = vmax.f32 %v938, 0.0
    %v1071 = vmax.f32 %v943, 0.0
    %v1072 = vmax.f32 %v946, 0.0
    %v1073 = vmax.f32 %v951, 0.0
    %v1074 = vmax.f32 %v954, 0.0
    %v1075 = vmax.f32 %v959, 0.0
    %v1076 = vmax.f32 %v962, 0.0
    %v1077 = vmax.f32 %v967, 0.0
    %v1078 = vmax.f32 %v970, 0.0
    %v1079 = vmax.f32 %v975, 0.0
    %v1080 = vmax.f32 %v978, 0.0
    %v1081 = vmax.f32 %v983, 0.0
    %v1082 = vmax.f32 %v986, 0.0
    %v1083 = vmax.f32 %v991, 0.0
    %v1084 = vmax.f32 %v994, 0.0
    %v1085 = vmax.f32 %v999, 0.0
    %v1086 = vmax.f32 %v1002, 0.0
    %v1087 = vmax.f32 %v1007, 0.0
    %v1088 = vmax.f32 %v1010, 0.0
    %v1089 = vmax.f32 %v1015, 0.0
    %v1090 = vmax.f32 %v1018, 0.0
    %v1091 = vmax.f32 %v1023, 0.0
    %v1092 = vmax.f32 %v1026, 0.0
    %v1093 = vld [vmem:[%s3] sm:$0xff]
    %v1094 = vld [vmem:[%s3 + $0x8] sm:$0xff]
    %v1095 = vld [vmem:[%s3 + $0x10] sm:$0xff]
    %v1096 = vld [vmem:[%s3 + $0x18] sm:$0xff]
    %v1097 = vld [vmem:[%s3 + $0x20] sm:$0xff]
    %v1098 = vld [vmem:[%s3 + $0x28] sm:$0xff]
    %v1099 = vld [vmem:[%s3 + $0x30] sm:$0xff]
    %v1100 = vld [vmem:[%s3 + $0x38] sm:$0xff]
    %v1101 = vld [vmem:[%s3 + $0x40] sm:$0xff]
    %v1102 = vld [vmem:[%s3 + $0x48] sm:$0xff]
    %v1103 = vld [vmem:[%s3 + $0x50] sm:$0xff]
    %v1104 = vld [vmem:[%s3 + $0x58] sm:$0xff]
    %v1105 = vld [vmem:[%s3 + $0x60] sm:$0xff]
    %v1106 = vld [vmem:[%s3 + $0x68] sm:$0xff]
    %v1107 = vld [vmem:[%s3 + $0x70] sm:$0xff]
    %v1108 = vld [vmem:[%s3 + $0x78] sm:$0xff]
    %v1109 = vld [vmem:[%s3 + $0x80] sm:$0xff]
    %v1110 = vld [vmem:[%s3 + $0x88] sm:$0xff]
    %v1111 = vld [vmem:[%s3 + $0x90] sm:$0xff]
    %v1112 = vld [vmem:[%s3 + $0x98] sm:$0xff]
    %v1113 = vld [vmem:[%s3 + $0xa0] sm:$0xff]
    %v1114 = vld [vmem:[%s3 + $0xa8] sm:$0xff]
    %v1115 = vld [vmem:[%s3 + $0xb0] sm:$0xff]
    %v1116 = vld [vmem:[%s3 + $0xb8] sm:$0xff]
    %v1117 = vld [vmem:[%s3 + $0xc0] sm:$0xff]
    %v1118 = vld [vmem:[%s3 + $0xc8] sm:$0xff]
    %v1119 = vld [vmem:[%s3 + $0xd0] sm:$0xff]
    %v1120 = vld [vmem:[%s3 + $0xd8] sm:$0xff]
    %v1121 = vld [vmem:[%s3 + $0xe0] sm:$0xff]
    %v1122 = vld [vmem:[%s3 + $0xe8] sm:$0xff]
    %v1123 = vld [vmem:[%s3 + $0xf0] sm:$0xff]
    %v1124 = vld [vmem:[%s3 + $0xf8] sm:$0xff]
    %v1125 = vld [vmem:[%s3 + $0x100] sm:$0xff]
    %v1126 = vld [vmem:[%s3 + $0x108] sm:$0xff]
    %v1127 = vld [vmem:[%s3 + $0x110] sm:$0xff]
    %v1128 = vld [vmem:[%s3 + $0x118] sm:$0xff]
    %v1129 = vld [vmem:[%s3 + $0x120] sm:$0xff]
    %v1130 = vld [vmem:[%s3 + $0x128] sm:$0xff]
    %v1131 = vld [vmem:[%s3 + $0x130] sm:$0xff]
    %v1132 = vld [vmem:[%s3 + $0x138] sm:$0xff]
    %v1133 = vld [vmem:[%s3 + $0x140] sm:$0xff]
    %v1134 = vld [vmem:[%s3 + $0x148] sm:$0xff]
    %v1135 = vld [vmem:[%s3 + $0x150] sm:$0xff]
    %v1136 = vld [vmem:[%s3 + $0x158] sm:$0xff]
    %v1137 = vld [vmem:[%s3 + $0x160] sm:$0xff]
    %v1138 = vld [vmem:[%s3 + $0x168] sm:$0xff]
    %v1139 = vld [vmem:[%s3 + $0x170] sm:$0xff]
    %v1140 = vld [vmem:[%s3 + $0x178] sm:$0xff]
    %v1141 = vld [vmem:[%s3 + $0x180] sm:$0xff]
    %v1142 = vld [vmem:[%s3 + $0x188] sm:$0xff]
    %v1143 = vld [vmem:[%s3 + $0x190] sm:$0xff]
    %v1144 = vld [vmem:[%s3 + $0x198] sm:$0xff]
    %v1145 = vld [vmem:[%s3 + $0x1a0] sm:$0xff]
    %v1146 = vld [vmem:[%s3 + $0x1a8] sm:$0xff]
    %v1147 = vld [vmem:[%s3 + $0x1b0] sm:$0xff]
    %v1148 = vld [vmem:[%s3 + $0x1b8] sm:$0xff]
    %v1149 = vld [vmem:[%s3 + $0x1c0] sm:$0xff]
    %v1150 = vld [vmem:[%s3 + $0x1c8] sm:$0xff]
    %v1151 = vld [vmem:[%s3 + $0x1d0] sm:$0xff]
    %v1152 = vld [vmem:[%s3 + $0x1d8] sm:$0xff]
    %v1153 = vld [vmem:[%s3 + $0x1e0] sm:$0xff]
    %v1154 = vld [vmem:[%s3 + $0x1e8] sm:$0xff]
    %v1155 = vld [vmem:[%s3 + $0x1f0] sm:$0xff]
    %v1156 = vld [vmem:[%s3 + $0x1f8] sm:$0xff]
    %v1157 = vpack.c.bf16 %v1030, %v1029
    %v1158 = vpack.c.bf16 %v1032, %v1031
    %v1159 = vpack.c.bf16 %v1034, %v1033
    %v1160 = vpack.c.bf16 %v1036, %v1035
    %v1161 = vpack.c.bf16 %v1038, %v1037
    %v1162 = vpack.c.bf16 %v1040, %v1039
    %v1163 = vpack.c.bf16 %v1042, %v1041
    %v1164 = vpack.c.bf16 %v1044, %v1043
    %v1165 = vpack.c.bf16 %v1046, %v1045
    %v1166 = vpack.c.bf16 %v1048, %v1047
    %v1167 = vpack.c.bf16 %v1050, %v1049
    %v1168 = vpack.c.bf16 %v1052, %v1051
    %v1169 = vpack.c.bf16 %v1054, %v1053
    %v1170 = vpack.c.bf16 %v1056, %v1055
    %v1171 = vpack.c.bf16 %v1058, %v1057
    %v1172 = vpack.c.bf16 %v1060, %v1059
    %v1173 = vpack.c.bf16 %v1062, %v1061
    %v1174 = vpack.c.bf16 %v1064, %v1063
    %v1175 = vpack.c.bf16 %v1066, %v1065
    %v1176 = vpack.c.bf16 %v1068, %v1067
    %v1177 = vpack.c.bf16 %v1070, %v1069
    %v1178 = vpack.c.bf16 %v1072, %v1071
    %v1179 = vpack.c.bf16 %v1074, %v1073
    %v1180 = vpack.c.bf16 %v1076, %v1075
    %v1181 = vpack.c.bf16 %v1078, %v1077
    %v1182 = vpack.c.bf16 %v1080, %v1079
    %v1183 = vpack.c.bf16 %v1082, %v1081
    %v1184 = vpack.c.bf16 %v1084, %v1083
    %v1185 = vpack.c.bf16 %v1086, %v1085
    %v1186 = vpack.c.bf16 %v1088, %v1087
    %v1187 = vpack.c.bf16 %v1090, %v1089
    %v1188 = vpack.c.bf16 %v1092, %v1091
    %v1189 = vld [vmem:[%s4] sm:$0xff]
    %v1190 = vld [vmem:[%s4 + $0x8] sm:$0xff]
    %v1191 = vld [vmem:[%s4 + $0x10] sm:$0xff]
    %v1192 = vld [vmem:[%s4 + $0x18] sm:$0xff]
    %v1193 = vld [vmem:[%s4 + $0x20] sm:$0xff]
    %v1194 = vld [vmem:[%s4 + $0x28] sm:$0xff]
    %v1195 = vld [vmem:[%s4 + $0x30] sm:$0xff]
    %v1196 = vld [vmem:[%s4 + $0x38] sm:$0xff]
    %v1197 = vld [vmem:[%s4 + $0x40] sm:$0xff]
    %v1198 = vld [vmem:[%s4 + $0x48] sm:$0xff]
    %v1199 = vld [vmem:[%s4 + $0x50] sm:$0xff]
    %v1200 = vld [vmem:[%s4 + $0x58] sm:$0xff]
    %v1201 = vld [vmem:[%s4 + $0x60] sm:$0xff]
    %v1202 = vld [vmem:[%s4 + $0x68] sm:$0xff]
    %v1203 = vld [vmem:[%s4 + $0x70] sm:$0xff]
    %v1204 = vld [vmem:[%s4 + $0x78] sm:$0xff]
    %v1205 = vld [vmem:[%s4 + $0x80] sm:$0xff]
    %v1206 = vld [vmem:[%s4 + $0x88] sm:$0xff]
    %v1207 = vld [vmem:[%s4 + $0x90] sm:$0xff]
    %v1208 = vld [vmem:[%s4 + $0x98] sm:$0xff]
    %v1209 = vld [vmem:[%s4 + $0xa0] sm:$0xff]
    %v1210 = vld [vmem:[%s4 + $0xa8] sm:$0xff]
    %v1211 = vld [vmem:[%s4 + $0xb0] sm:$0xff]
    %v1212 = vld [vmem:[%s4 + $0xb8] sm:$0xff]
    %v1213 = vld [vmem:[%s4 + $0xc0] sm:$0xff]
    %v1214 = vld [vmem:[%s4 + $0xc8] sm:$0xff]
    %v1215 = vld [vmem:[%s4 + $0xd0] sm:$0xff]
    %v1216 = vld [vmem:[%s4 + $0xd8] sm:$0xff]
    %v1217 = vld [vmem:[%s4 + $0xe0] sm:$0xff]
    %v1218 = vld [vmem:[%s4 + $0xe8] sm:$0xff]
    %v1219 = vld [vmem:[%s4 + $0xf0] sm:$0xff]
    %v1220 = vld [vmem:[%s4 + $0xf8] sm:$0xff]
    %1222 = vset.pattern.permute.xlu0 0
    %1223 = vperm.xlu0 %1222, %v1189
    %v1224 = vpop.permute.xlu0 %1223
    %1227 = vset.pattern.permute.xlu0 0
    %1228 = vperm.xlu0 %1227, %v1190
    %v1229 = vpop.permute.xlu0 %1228
    %1232 = vset.pattern.permute.xlu0 0
    %1233 = vperm.xlu0 %1232, %v1191
    %v1234 = vpop.permute.xlu0 %1233
    %1237 = vset.pattern.permute.xlu0 0
    %1238 = vperm.xlu0 %1237, %v1192
    %v1239 = vpop.permute.xlu0 %1238
    %1242 = vset.pattern.permute.xlu0 0
    %1243 = vperm.xlu0 %1242, %v1193
    %v1244 = vpop.permute.xlu0 %1243
    %1247 = vset.pattern.permute.xlu0 0
    %1248 = vperm.xlu0 %1247, %v1194
    %v1249 = vpop.permute.xlu0 %1248
    %1252 = vset.pattern.permute.xlu0 0
    %1253 = vperm.xlu0 %1252, %v1195
    %v1254 = vpop.permute.xlu0 %1253
    %1257 = vset.pattern.permute.xlu0 0
    %1258 = vperm.xlu0 %1257, %v1196
    %v1259 = vpop.permute.xlu0 %1258
    %1262 = vset.pattern.permute.xlu0 0
    %1263 = vperm.xlu0 %1262, %v1197
    %v1264 = vpop.permute.xlu0 %1263
    %1267 = vset.pattern.permute.xlu0 0
    %1268 = vperm.xlu0 %1267, %v1198
    %v1269 = vpop.permute.xlu0 %1268
    %1272 = vset.pattern.permute.xlu0 0
    %1273 = vperm.xlu0 %1272, %v1199
    %v1274 = vpop.permute.xlu0 %1273
    %1277 = vset.pattern.permute.xlu0 0
    %1278 = vperm.xlu0 %1277, %v1200
    %v1279 = vpop.permute.xlu0 %1278
    %1282 = vset.pattern.permute.xlu0 0
    %1283 = vperm.xlu0 %1282, %v1201
    %v1284 = vpop.permute.xlu0 %1283
    %1287 = vset.pattern.permute.xlu0 0
    %1288 = vperm.xlu0 %1287, %v1202
    %v1289 = vpop.permute.xlu0 %1288
    %1292 = vset.pattern.permute.xlu0 0
    %1293 = vperm.xlu0 %1292, %v1203
    %v1294 = vpop.permute.xlu0 %1293
    %1297 = vset.pattern.permute.xlu0 0
    %1298 = vperm.xlu0 %1297, %v1204
    %v1299 = vpop.permute.xlu0 %1298
    %1302 = vset.pattern.permute.xlu0 0
    %1303 = vperm.xlu0 %1302, %v1205
    %v1304 = vpop.permute.xlu0 %1303
    %1307 = vset.pattern.permute.xlu0 0
    %1308 = vperm.xlu0 %1307, %v1206
    %v1309 = vpop.permute.xlu0 %1308
    %1312 = vset.pattern.permute.xlu0 0
    %1313 = vperm.xlu0 %1312, %v1207
    %v1314 = vpop.permute.xlu0 %1313
    %1317 = vset.pattern.permute.xlu0 0
    %1318 = vperm.xlu0 %1317, %v1208
    %v1319 = vpop.permute.xlu0 %1318
    %1322 = vset.pattern.permute.xlu0 0
    %1323 = vperm.xlu0 %1322, %v1209
    %v1324 = vpop.permute.xlu0 %1323
    %1327 = vset.pattern.permute.xlu0 0
    %1328 = vperm.xlu0 %1327, %v1210
    %v1329 = vpop.permute.xlu0 %1328
    %1332 = vset.pattern.permute.xlu0 0
    %1333 = vperm.xlu0 %1332, %v1211
    %v1334 = vpop.permute.xlu0 %1333
    %1337 = vset.pattern.permute.xlu0 0
    %1338 = vperm.xlu0 %1337, %v1212
    %v1339 = vpop.permute.xlu0 %1338
    %1342 = vset.pattern.permute.xlu0 0
    %1343 = vperm.xlu0 %1342, %v1213
    %v1344 = vpop.permute.xlu0 %1343
    %1347 = vset.pattern.permute.xlu0 0
    %1348 = vperm.xlu0 %1347, %v1214
    %v1349 = vpop.permute.xlu0 %1348
    %1352 = vset.pattern.permute.xlu0 0
    %1353 = vperm.xlu0 %1352, %v1215
    %v1354 = vpop.permute.xlu0 %1353
    %1357 = vset.pattern.permute.xlu0 0
    %1358 = vperm.xlu0 %1357, %v1216
    %v1359 = vpop.permute.xlu0 %1358
    %1362 = vset.pattern.permute.xlu0 0
    %1363 = vperm.xlu0 %1362, %v1217
    %v1364 = vpop.permute.xlu0 %1363
    %1367 = vset.pattern.permute.xlu0 0
    %1368 = vperm.xlu0 %1367, %v1218
    %v1369 = vpop.permute.xlu0 %1368
    %1372 = vset.pattern.permute.xlu0 0
    %1373 = vperm.xlu0 %1372, %v1219
    %v1374 = vpop.permute.xlu0 %1373
    %1377 = vset.pattern.permute.xlu0 0
    %1378 = vperm.xlu0 %1377, %v1220
    %v1379 = vpop.permute.xlu0 %1378
    %v1445 = vunpack.c.l.b16 %v1093
    %v1446 = vunpack.c.h.b16 %v1093
    %v1447 = vunpack.c.l.b16 %v1094
    %v1448 = vunpack.c.h.b16 %v1094
    %v1449 = vunpack.c.l.b16 %v1095
    %v1450 = vunpack.c.h.b16 %v1095
    %v1451 = vunpack.c.l.b16 %v1096
    %v1452 = vunpack.c.h.b16 %v1096
    %v1453 = vunpack.c.l.b16 %v1097
    %v1454 = vunpack.c.h.b16 %v1097
    %v1455 = vunpack.c.l.b16 %v1098
    %v1456 = vunpack.c.h.b16 %v1098
    %v1457 = vunpack.c.l.b16 %v1099
    %v1458 = vunpack.c.h.b16 %v1099
    %v1459 = vunpack.c.l.b16 %v1100
    %v1460 = vunpack.c.h.b16 %v1100
    %v1461 = vunpack.c.l.b16 %v1101
    %v1462 = vunpack.c.h.b16 %v1101
    %v1463 = vunpack.c.l.b16 %v1102
    %v1464 = vunpack.c.h.b16 %v1102
    %v1465 = vunpack.c.l.b16 %v1103
    %v1466 = vunpack.c.h.b16 %v1103
    %v1467 = vunpack.c.l.b16 %v1104
    %v1468 = vunpack.c.h.b16 %v1104
    %v1469 = vunpack.c.l.b16 %v1105
    %v1470 = vunpack.c.h.b16 %v1105
    %v1471 = vunpack.c.l.b16 %v1106
    %v1472 = vunpack.c.h.b16 %v1106
    %v1473 = vunpack.c.l.b16 %v1107
    %v1474 = vunpack.c.h.b16 %v1107
    %v1475 = vunpack.c.l.b16 %v1108
    %v1476 = vunpack.c.h.b16 %v1108
    %v1477 = vunpack.c.l.b16 %v1109
    %v1478 = vunpack.c.h.b16 %v1109
    %v1479 = vunpack.c.l.b16 %v1110
    %v1480 = vunpack.c.h.b16 %v1110
    %v1481 = vunpack.c.l.b16 %v1111
    %v1482 = vunpack.c.h.b16 %v1111
    %v1483 = vunpack.c.l.b16 %v1112
    %v1484 = vunpack.c.h.b16 %v1112
    %v1485 = vunpack.c.l.b16 %v1113
    %v1486 = vunpack.c.h.b16 %v1113
    %v1487 = vunpack.c.l.b16 %v1114
    %v1488 = vunpack.c.h.b16 %v1114
    %v1489 = vunpack.c.l.b16 %v1115
    %v1490 = vunpack.c.h.b16 %v1115
    %v1491 = vunpack.c.l.b16 %v1116
    %v1492 = vunpack.c.h.b16 %v1116
    %v1493 = vunpack.c.l.b16 %v1117
    %v1494 = vunpack.c.h.b16 %v1117
    %v1495 = vunpack.c.l.b16 %v1118
    %v1496 = vunpack.c.h.b16 %v1118
    %v1497 = vunpack.c.l.b16 %v1119
    %v1498 = vunpack.c.h.b16 %v1119
    %v1499 = vunpack.c.l.b16 %v1120
    %v1500 = vunpack.c.h.b16 %v1120
    %v1501 = vunpack.c.l.b16 %v1121
    %v1502 = vunpack.c.h.b16 %v1121
    %v1503 = vunpack.c.l.b16 %v1122
    %v1504 = vunpack.c.h.b16 %v1122
    %v1505 = vunpack.c.l.b16 %v1123
    %v1506 = vunpack.c.h.b16 %v1123
    %v1507 = vunpack.c.l.b16 %v1124
    %v1508 = vunpack.c.h.b16 %v1124
    %v1509 = vunpack.c.l.b16 %v1125
    %v1510 = vunpack.c.h.b16 %v1125
    %v1511 = vunpack.c.l.b16 %v1126
    %v1512 = vunpack.c.h.b16 %v1126
    %v1513 = vunpack.c.l.b16 %v1127
    %v1514 = vunpack.c.h.b16 %v1127
    %v1515 = vunpack.c.l.b16 %v1128
    %v1516 = vunpack.c.h.b16 %v1128
    %v1517 = vunpack.c.l.b16 %v1129
    %v1518 = vunpack.c.h.b16 %v1129
    %v1519 = vunpack.c.l.b16 %v1130
    %v1520 = vunpack.c.h.b16 %v1130
    %v1521 = vunpack.c.l.b16 %v1131
    %v1522 = vunpack.c.h.b16 %v1131
    %v1523 = vunpack.c.l.b16 %v1132
    %v1524 = vunpack.c.h.b16 %v1132
    %v1525 = vunpack.c.l.b16 %v1133
    %v1526 = vunpack.c.h.b16 %v1133
    %v1527 = vunpack.c.l.b16 %v1134
    %v1528 = vunpack.c.h.b16 %v1134
    %v1529 = vunpack.c.l.b16 %v1135
    %v1530 = vunpack.c.h.b16 %v1135
    %v1531 = vunpack.c.l.b16 %v1136
    %v1532 = vunpack.c.h.b16 %v1136
    %v1533 = vunpack.c.l.b16 %v1137
    %v1534 = vunpack.c.h.b16 %v1137
    %v1535 = vunpack.c.l.b16 %v1138
    %v1536 = vunpack.c.h.b16 %v1138
    %v1537 = vunpack.c.l.b16 %v1139
    %v1538 = vunpack.c.h.b16 %v1139
    %v1539 = vunpack.c.l.b16 %v1140
    %v1540 = vunpack.c.h.b16 %v1140
    %v1541 = vunpack.c.l.b16 %v1141
    %v1542 = vunpack.c.h.b16 %v1141
    %v1543 = vunpack.c.l.b16 %v1142
    %v1544 = vunpack.c.h.b16 %v1142
    %v1545 = vunpack.c.l.b16 %v1143
    %v1546 = vunpack.c.h.b16 %v1143
    %v1547 = vunpack.c.l.b16 %v1144
    %v1548 = vunpack.c.h.b16 %v1144
    %v1549 = vunpack.c.l.b16 %v1145
    %v1550 = vunpack.c.h.b16 %v1145
    %v1551 = vunpack.c.l.b16 %v1146
    %v1552 = vunpack.c.h.b16 %v1146
    %v1553 = vunpack.c.l.b16 %v1147
    %v1554 = vunpack.c.h.b16 %v1147
    %v1555 = vunpack.c.l.b16 %v1148
    %v1556 = vunpack.c.h.b16 %v1148
    %v1557 = vunpack.c.l.b16 %v1149
    %v1558 = vunpack.c.h.b16 %v1149
    %v1559 = vunpack.c.l.b16 %v1150
    %v1560 = vunpack.c.h.b16 %v1150
    %v1561 = vunpack.c.l.b16 %v1151
    %v1562 = vunpack.c.h.b16 %v1151
    %v1563 = vunpack.c.l.b16 %v1152
    %v1564 = vunpack.c.h.b16 %v1152
    %v1565 = vunpack.c.l.b16 %v1153
    %v1566 = vunpack.c.h.b16 %v1153
    %v1567 = vunpack.c.l.b16 %v1154
    %v1568 = vunpack.c.h.b16 %v1154
    %v1569 = vunpack.c.l.b16 %v1155
    %v1570 = vunpack.c.h.b16 %v1155
    %v1571 = vunpack.c.l.b16 %v1156
    %v1572 = vunpack.c.h.b16 %v1156
    %v1573 = vpack.c.b16 %v1449, %v1445
    %v1574 = vpack.c.b16 %v1450, %v1446
    %v1575 = vpack.c.b16 %v1451, %v1447
    %v1576 = vpack.c.b16 %v1452, %v1448
    %v1577 = vpack.c.b16 %v1457, %v1453
    %v1578 = vpack.c.b16 %v1458, %v1454
    %v1579 = vpack.c.b16 %v1459, %v1455
    %v1580 = vpack.c.b16 %v1460, %v1456
    %v1581 = vpack.c.b16 %v1465, %v1461
    %v1582 = vpack.c.b16 %v1466, %v1462
    %v1583 = vpack.c.b16 %v1467, %v1463
    %v1584 = vpack.c.b16 %v1468, %v1464
    %v1585 = vpack.c.b16 %v1473, %v1469
    %v1586 = vpack.c.b16 %v1474, %v1470
    %v1587 = vpack.c.b16 %v1475, %v1471
    %v1588 = vpack.c.b16 %v1476, %v1472
    %v1589 = vpack.c.b16 %v1481, %v1477
    %v1590 = vpack.c.b16 %v1482, %v1478
    %v1591 = vpack.c.b16 %v1483, %v1479
    %v1592 = vpack.c.b16 %v1484, %v1480
    %v1593 = vpack.c.b16 %v1489, %v1485
    %v1594 = vpack.c.b16 %v1490, %v1486
    %v1595 = vpack.c.b16 %v1491, %v1487
    %v1596 = vpack.c.b16 %v1492, %v1488
    %v1597 = vpack.c.b16 %v1497, %v1493
    %v1598 = vpack.c.b16 %v1498, %v1494
    %v1599 = vpack.c.b16 %v1499, %v1495
    %v1600 = vpack.c.b16 %v1500, %v1496
    %v1601 = vpack.c.b16 %v1505, %v1501
    %v1602 = vpack.c.b16 %v1506, %v1502
    %v1603 = vpack.c.b16 %v1507, %v1503
    %v1604 = vpack.c.b16 %v1508, %v1504
    %v1605 = vpack.c.b16 %v1513, %v1509
    %v1606 = vpack.c.b16 %v1514, %v1510
    %v1607 = vpack.c.b16 %v1515, %v1511
    %v1608 = vpack.c.b16 %v1516, %v1512
    %v1609 = vpack.c.b16 %v1521, %v1517
    %v1610 = vpack.c.b16 %v1522, %v1518
    %v1611 = vpack.c.b16 %v1523, %v1519
    %v1612 = vpack.c.b16 %v1524, %v1520
    %v1613 = vpack.c.b16 %v1529, %v1525
    %v1614 = vpack.c.b16 %v1530, %v1526
    %v1615 = vpack.c.b16 %v1531, %v1527
    %v1616 = vpack.c.b16 %v1532, %v1528
    %v1617 = vpack.c.b16 %v1537, %v1533
    %v1618 = vpack.c.b16 %v1538, %v1534
    %v1619 = vpack.c.b16 %v1539, %v1535
    %v1620 = vpack.c.b16 %v1540, %v1536
    %v1621 = vpack.c.b16 %v1545, %v1541
    %v1622 = vpack.c.b16 %v1546, %v1542
    %v1623 = vpack.c.b16 %v1547, %v1543
    %v1624 = vpack.c.b16 %v1548, %v1544
    %v1625 = vpack.c.b16 %v1553, %v1549
    %v1626 = vpack.c.b16 %v1554, %v1550
    %v1627 = vpack.c.b16 %v1555, %v1551
    %v1628 = vpack.c.b16 %v1556, %v1552
    %v1629 = vpack.c.b16 %v1561, %v1557
    %v1630 = vpack.c.b16 %v1562, %v1558
    %v1631 = vpack.c.b16 %v1563, %v1559
    %v1632 = vpack.c.b16 %v1564, %v1560
    %v1633 = vpack.c.b16 %v1569, %v1565
    %v1634 = vpack.c.b16 %v1570, %v1566
    %v1635 = vpack.c.b16 %v1571, %v1567
    %v1636 = vpack.c.b16 %v1572, %v1568
    %1701 = vmatprep.subr.bf16.mxu0 0
    %1702 = vmatpush1.bf16.msra.mxu0 %v1164
    %1703 = vmatprep.subr.bf16.mxu0 0
    %1704 = vmatpush1.bf16.msra.mxu0 %v1163
    %1705 = vmatprep.subr.bf16.mxu0 0
    %1706 = vmatpush1.bf16.msra.mxu0 %v1162
    %1707 = vmatprep.subr.bf16.mxu0 0
    %1708 = vmatpush1.bf16.msra.mxu0 %v1161
    %1709 = vmatprep.subr.bf16.mxu0 0
    %1710 = vmatpush1.bf16.msra.mxu0 %v1160
    %1711 = vmatprep.subr.bf16.mxu0 0
    %1712 = vmatpush1.bf16.msra.mxu0 %v1159
    %1713 = vmatprep.subr.bf16.mxu0 0
    %1714 = vmatpush1.bf16.msra.mxu0 %v1158
    %1715 = vmatprep.subr.bf16.mxu0 0
    %1716 = vmatpush1.bf16.msra.mxu0 %v1157
    %1717 = vmatprep.subr.bf16.mxu0 0
    %1718 = vmatpush2.bf16.msra.mxu0 %v1172
    %1719 = vmatprep.subr.bf16.mxu0 0
    %1720 = vmatpush2.bf16.msra.mxu0 %v1171
    %1721 = vmatprep.subr.bf16.mxu0 0
    %1722 = vmatpush2.bf16.msra.mxu0 %v1170
    %1723 = vmatprep.subr.bf16.mxu0 0
    %1724 = vmatpush2.bf16.msra.mxu0 %v1169
    %1725 = vmatprep.subr.bf16.mxu0 0
    %1726 = vmatpush2.bf16.msra.mxu0 %v1168
    %1727 = vmatprep.subr.bf16.mxu0 0
    %1728 = vmatpush2.bf16.msra.mxu0 %v1167
    %1729 = vmatprep.subr.bf16.mxu0 0
    %1730 = vmatpush2.bf16.msra.mxu0 %v1166
    %1731 = vmatprep.subr.bf16.mxu0 0
    %1732 = vmatpush2.bf16.msra.mxu0 %v1165
    %1733 = vmatprep.mubr.bf16.mxu0 %v1574
    %1734 = vmatmul.mubr.bf16.gmra.mxu0 %v1573
    %v1735 = vpop.f32.mrf.mxu0
    %v1736 = vadd.f32 %v1224, %v1735
    %v1737 = vpop.f32.mrf.mxu0
    %v1738 = vpop.f32.mrf.mxu0
    %v1739 = vadd.f32 %v1229, %v1738
    %v1740 = vpop.f32.mrf.mxu0
    %1741 = vmatprep.mubr.bf16.mxu0 %v1578
    %1742 = vmatmul.mubr.bf16.gmra.mxu0 %v1577
    %v1743 = vpop.f32.mrf.mxu0
    %v1744 = vadd.f32 %v1234, %v1743
    %v1745 = vpop.f32.mrf.mxu0
    %v1746 = vpop.f32.mrf.mxu0
    %v1747 = vadd.f32 %v1239, %v1746
    %v1748 = vpop.f32.mrf.mxu0
    %1749 = vmatprep.mubr.bf16.mxu0 %v1582
    %1750 = vmatmul.mubr.bf16.gmra.mxu0 %v1581
    %v1751 = vpop.f32.mrf.mxu0
    %v1752 = vadd.f32 %v1244, %v1751
    %v1753 = vpop.f32.mrf.mxu0
    %v1754 = vpop.f32.mrf.mxu0
    %v1755 = vadd.f32 %v1249, %v1754
    %v1756 = vpop.f32.mrf.mxu0
    %1757 = vmatprep.mubr.bf16.mxu0 %v1586
    %1758 = vmatmul.mubr.bf16.gmra.mxu0 %v1585
    %v1759 = vpop.f32.mrf.mxu0
    %v1760 = vadd.f32 %v1254, %v1759
    %v1761 = vpop.f32.mrf.mxu0
    %v1762 = vpop.f32.mrf.mxu0
    %v1763 = vadd.f32 %v1259, %v1762
    %v1764 = vpop.f32.mrf.mxu0
    %1765 = vmatprep.mubr.bf16.mxu0 %v1590
    %1766 = vmatmul.mubr.bf16.gmra.mxu0 %v1589
    %v1767 = vpop.f32.mrf.mxu0
    %v1768 = vadd.f32 %v1264, %v1767
    %v1769 = vpop.f32.mrf.mxu0
    %v1770 = vpop.f32.mrf.mxu0
    %v1771 = vadd.f32 %v1269, %v1770
    %v1772 = vpop.f32.mrf.mxu0
    %1773 = vmatprep.mubr.bf16.mxu0 %v1594
    %1774 = vmatmul.mubr.bf16.gmra.mxu0 %v1593
    %v1775 = vpop.f32.mrf.mxu0
    %v1776 = vadd.f32 %v1274, %v1775
    %v1777 = vpop.f32.mrf.mxu0
    %v1778 = vpop.f32.mrf.mxu0
    %v1779 = vadd.f32 %v1279, %v1778
    %v1780 = vpop.f32.mrf.mxu0
    %1781 = vmatprep.mubr.bf16.mxu0 %v1598
    %1782 = vmatmul.mubr.bf16.gmra.mxu0 %v1597
    %v1783 = vpop.f32.mrf.mxu0
    %v1784 = vadd.f32 %v1284, %v1783
    %v1785 = vpop.f32.mrf.mxu0
    %v1786 = vpop.f32.mrf.mxu0
    %v1787 = vadd.f32 %v1289, %v1786
    %v1788 = vpop.f32.mrf.mxu0
    %1789 = vmatprep.mubr.bf16.mxu0 %v1602
    %1790 = vmatmul.mubr.bf16.gmra.mxu0 %v1601
    %v1791 = vpop.f32.mrf.mxu0
    %v1792 = vadd.f32 %v1294, %v1791
    %v1793 = vpop.f32.mrf.mxu0
    %v1794 = vpop.f32.mrf.mxu0
    %v1795 = vadd.f32 %v1299, %v1794
    %v1796 = vpop.f32.mrf.mxu0
    %1797 = vmatprep.mubr.bf16.mxu0 %v1606
    %1798 = vmatmul.mubr.bf16.gmra.mxu0 %v1605
    %v1799 = vpop.f32.mrf.mxu0
    %v1800 = vadd.f32 %v1304, %v1799
    %v1801 = vpop.f32.mrf.mxu0
    %v1802 = vpop.f32.mrf.mxu0
    %v1803 = vadd.f32 %v1309, %v1802
    %v1804 = vpop.f32.mrf.mxu0
    %1805 = vmatprep.mubr.bf16.mxu0 %v1610
    %1806 = vmatmul.mubr.bf16.gmra.mxu0 %v1609
    %v1807 = vpop.f32.mrf.mxu0
    %v1808 = vadd.f32 %v1314, %v1807
    %v1809 = vpop.f32.mrf.mxu0
    %v1810 = vpop.f32.mrf.mxu0
    %v1811 = vadd.f32 %v1319, %v1810
    %v1812 = vpop.f32.mrf.mxu0
    %1813 = vmatprep.mubr.bf16.mxu0 %v1614
    %1814 = vmatmul.mubr.bf16.gmra.mxu0 %v1613
    %v1815 = vpop.f32.mrf.mxu0
    %v1816 = vadd.f32 %v1324, %v1815
    %v1817 = vpop.f32.mrf.mxu0
    %v1818 = vpop.f32.mrf.mxu0
    %v1819 = vadd.f32 %v1329, %v1818
    %v1820 = vpop.f32.mrf.mxu0
    %1821 = vmatprep.mubr.bf16.mxu0 %v1618
    %1822 = vmatmul.mubr.bf16.gmra.mxu0 %v1617
    %v1823 = vpop.f32.mrf.mxu0
    %v1824 = vadd.f32 %v1334, %v1823
    %v1825 = vpop.f32.mrf.mxu0
    %v1826 = vpop.f32.mrf.mxu0
    %v1827 = vadd.f32 %v1339, %v1826
    %v1828 = vpop.f32.mrf.mxu0
    %1829 = vmatprep.mubr.bf16.mxu0 %v1622
    %1830 = vmatmul.mubr.bf16.gmra.mxu0 %v1621
    %v1831 = vpop.f32.mrf.mxu0
    %v1832 = vadd.f32 %v1344, %v1831
    %v1833 = vpop.f32.mrf.mxu0
    %v1834 = vpop.f32.mrf.mxu0
    %v1835 = vadd.f32 %v1349, %v1834
    %v1836 = vpop.f32.mrf.mxu0
    %1837 = vmatprep.mubr.bf16.mxu0 %v1626
    %1838 = vmatmul.mubr.bf16.gmra.mxu0 %v1625
    %v1839 = vpop.f32.mrf.mxu0
    %v1840 = vadd.f32 %v1354, %v1839
    %v1841 = vpop.f32.mrf.mxu0
    %v1842 = vpop.f32.mrf.mxu0
    %v1843 = vadd.f32 %v1359, %v1842
    %v1844 = vpop.f32.mrf.mxu0
    %1845 = vmatprep.mubr.bf16.mxu0 %v1630
    %1846 = vmatmul.mubr.bf16.gmra.mxu0 %v1629
    %v1847 = vpop.f32.mrf.mxu0
    %v1848 = vadd.f32 %v1364, %v1847
    %v1849 = vpop.f32.mrf.mxu0
    %v1850 = vpop.f32.mrf.mxu0
    %v1851 = vadd.f32 %v1369, %v1850
    %v1852 = vpop.f32.mrf.mxu0
    %1853 = vmatprep.mubr.bf16.mxu0 %v1634
    %1854 = vmatmul.mubr.bf16.gmra.mxu0 %v1633
    %v1855 = vpop.f32.mrf.mxu0
    %v1856 = vadd.f32 %v1374, %v1855
    %v1857 = vpop.f32.mrf.mxu0
    %v1858 = vpop.f32.mrf.mxu0
    %v1859 = vadd.f32 %v1379, %v1858
    %v1860 = vpop.f32.mrf.mxu0
    %1861 = vdwg.mxu0
    %1862 = vmatprep.subr.bf16.mxu0 0
    %1863 = vmatpush1.bf16.msra.mxu0 %v1180
    %1864 = vmatprep.subr.bf16.mxu0 0
    %1865 = vmatpush1.bf16.msra.mxu0 %v1179
    %1866 = vmatprep.subr.bf16.mxu0 0
    %1867 = vmatpush1.bf16.msra.mxu0 %v1178
    %1868 = vmatprep.subr.bf16.mxu0 0
    %1869 = vmatpush1.bf16.msra.mxu0 %v1177
    %1870 = vmatprep.subr.bf16.mxu0 0
    %1871 = vmatpush1.bf16.msra.mxu0 %v1176
    %1872 = vmatprep.subr.bf16.mxu0 0
    %1873 = vmatpush1.bf16.msra.mxu0 %v1175
    %1874 = vmatprep.subr.bf16.mxu0 0
    %1875 = vmatpush1.bf16.msra.mxu0 %v1174
    %1876 = vmatprep.subr.bf16.mxu0 0
    %1877 = vmatpush1.bf16.msra.mxu0 %v1173
    %1878 = vmatprep.subr.bf16.mxu0 0
    %1879 = vmatpush2.bf16.msra.mxu0 %v1188
    %1880 = vmatprep.subr.bf16.mxu0 0
    %1881 = vmatpush2.bf16.msra.mxu0 %v1187
    %1882 = vmatprep.subr.bf16.mxu0 0
    %1883 = vmatpush2.bf16.msra.mxu0 %v1186
    %1884 = vmatprep.subr.bf16.mxu0 0
    %1885 = vmatpush2.bf16.msra.mxu0 %v1185
    %1886 = vmatprep.subr.bf16.mxu0 0
    %1887 = vmatpush2.bf16.msra.mxu0 %v1184
    %1888 = vmatprep.subr.bf16.mxu0 0
    %1889 = vmatpush2.bf16.msra.mxu0 %v1183
    %1890 = vmatprep.subr.bf16.mxu0 0
    %1891 = vmatpush2.bf16.msra.mxu0 %v1182
    %1892 = vmatprep.subr.bf16.mxu0 0
    %1893 = vmatpush2.bf16.msra.mxu0 %v1181
    %1894 = vmatprep.mubr.bf16.mxu0 %v1576
    %1895 = vmatmul.mubr.bf16.gmra.mxu0 %v1575
    %v1896 = vpop.f32.mrf.mxu0
    %v1897 = vadd.f32 %v1736, %v1896
    %v1898 = vpop.f32.mrf.mxu0
    %v1899 = vpop.f32.mrf.mxu0
    %v1900 = vadd.f32 %v1739, %v1899
    %v1901 = vpop.f32.mrf.mxu0
    %1902 = vmatprep.mubr.bf16.mxu0 %v1580
    %1903 = vmatmul.mubr.bf16.gmra.mxu0 %v1579
    %v1904 = vpop.f32.mrf.mxu0
    %v1905 = vadd.f32 %v1744, %v1904
    %v1906 = vpop.f32.mrf.mxu0
    %v1907 = vpop.f32.mrf.mxu0
    %v1908 = vadd.f32 %v1747, %v1907
    %v1909 = vpop.f32.mrf.mxu0
    %1910 = vmatprep.mubr.bf16.mxu0 %v1584
    %1911 = vmatmul.mubr.bf16.gmra.mxu0 %v1583
    %v1912 = vpop.f32.mrf.mxu0
    %v1913 = vadd.f32 %v1752, %v1912
    %v1914 = vpop.f32.mrf.mxu0
    %v1915 = vpop.f32.mrf.mxu0
    %v1916 = vadd.f32 %v1755, %v1915
    %v1917 = vpop.f32.mrf.mxu0
    %1918 = vmatprep.mubr.bf16.mxu0 %v1588
    %1919 = vmatmul.mubr.bf16.gmra.mxu0 %v1587
    %v1920 = vpop.f32.mrf.mxu0
    %v1921 = vadd.f32 %v1760, %v1920
    %v1922 = vpop.f32.mrf.mxu0
    %v1923 = vpop.f32.mrf.mxu0
    %v1924 = vadd.f32 %v1763, %v1923
    %v1925 = vpop.f32.mrf.mxu0
    %1926 = vmatprep.mubr.bf16.mxu0 %v1592
    %1927 = vmatmul.mubr.bf16.gmra.mxu0 %v1591
    %v1928 = vpop.f32.mrf.mxu0
    %v1929 = vadd.f32 %v1768, %v1928
    %v1930 = vpop.f32.mrf.mxu0
    %v1931 = vpop.f32.mrf.mxu0
    %v1932 = vadd.f32 %v1771, %v1931
    %v1933 = vpop.f32.mrf.mxu0
    %1934 = vmatprep.mubr.bf16.mxu0 %v1596
    %1935 = vmatmul.mubr.bf16.gmra.mxu0 %v1595
    %v1936 = vpop.f32.mrf.mxu0
    %v1937 = vadd.f32 %v1776, %v1936
    %v1938 = vpop.f32.mrf.mxu0
    %v1939 = vpop.f32.mrf.mxu0
    %v1940 = vadd.f32 %v1779, %v1939
    %v1941 = vpop.f32.mrf.mxu0
    %1942 = vmatprep.mubr.bf16.mxu0 %v1600
    %1943 = vmatmul.mubr.bf16.gmra.mxu0 %v1599
    %v1944 = vpop.f32.mrf.mxu0
    %v1945 = vadd.f32 %v1784, %v1944
    %v1946 = vpop.f32.mrf.mxu0
    %v1947 = vpop.f32.mrf.mxu0
    %v1948 = vadd.f32 %v1787, %v1947
    %v1949 = vpop.f32.mrf.mxu0
    %1950 = vmatprep.mubr.bf16.mxu0 %v1604
    %1951 = vmatmul.mubr.bf16.gmra.mxu0 %v1603
    %v1952 = vpop.f32.mrf.mxu0
    %v1953 = vadd.f32 %v1792, %v1952
    %v1954 = vpop.f32.mrf.mxu0
    %v1955 = vpop.f32.mrf.mxu0
    %v1956 = vadd.f32 %v1795, %v1955
    %v1957 = vpop.f32.mrf.mxu0
    %1958 = vmatprep.mubr.bf16.mxu0 %v1608
    %1959 = vmatmul.mubr.bf16.gmra.mxu0 %v1607
    %v1960 = vpop.f32.mrf.mxu0
    %v1961 = vadd.f32 %v1800, %v1960
    %v1962 = vpop.f32.mrf.mxu0
    %v1963 = vpop.f32.mrf.mxu0
    %v1964 = vadd.f32 %v1803, %v1963
    %v1965 = vpop.f32.mrf.mxu0
    %1966 = vmatprep.mubr.bf16.mxu0 %v1612
    %1967 = vmatmul.mubr.bf16.gmra.mxu0 %v1611
    %v1968 = vpop.f32.mrf.mxu0
    %v1969 = vadd.f32 %v1808, %v1968
    %v1970 = vpop.f32.mrf.mxu0
    %v1971 = vpop.f32.mrf.mxu0
    %v1972 = vadd.f32 %v1811, %v1971
    %v1973 = vpop.f32.mrf.mxu0
    %1974 = vmatprep.mubr.bf16.mxu0 %v1616
    %1975 = vmatmul.mubr.bf16.gmra.mxu0 %v1615
    %v1976 = vpop.f32.mrf.mxu0
    %v1977 = vadd.f32 %v1816, %v1976
    %v1978 = vpop.f32.mrf.mxu0
    %v1979 = vpop.f32.mrf.mxu0
    %v1980 = vadd.f32 %v1819, %v1979
    %v1981 = vpop.f32.mrf.mxu0
    %1982 = vmatprep.mubr.bf16.mxu0 %v1620
    %1983 = vmatmul.mubr.bf16.gmra.mxu0 %v1619
    %v1984 = vpop.f32.mrf.mxu0
    %v1985 = vadd.f32 %v1824, %v1984
    %v1986 = vpop.f32.mrf.mxu0
    %v1987 = vpop.f32.mrf.mxu0
    %v1988 = vadd.f32 %v1827, %v1987
    %v1989 = vpop.f32.mrf.mxu0
    %1990 = vmatprep.mubr.bf16.mxu0 %v1624
    %1991 = vmatmul.mubr.bf16.gmra.mxu0 %v1623
    %v1992 = vpop.f32.mrf.mxu0
    %v1993 = vadd.f32 %v1832, %v1992
    %v1994 = vpop.f32.mrf.mxu0
    %v1995 = vpop.f32.mrf.mxu0
    %v1996 = vadd.f32 %v1835, %v1995
    %v1997 = vpop.f32.mrf.mxu0
    %1998 = vmatprep.mubr.bf16.mxu0 %v1628
    %1999 = vmatmul.mubr.bf16.gmra.mxu0 %v1627
    %v2000 = vpop.f32.mrf.mxu0
    %v2001 = vadd.f32 %v1840, %v2000
    %v2002 = vpop.f32.mrf.mxu0
    %v2003 = vpop.f32.mrf.mxu0
    %v2004 = vadd.f32 %v1843, %v2003
    %v2005 = vpop.f32.mrf.mxu0
    %2006 = vmatprep.mubr.bf16.mxu0 %v1632
    %2007 = vmatmul.mubr.bf16.gmra.mxu0 %v1631
    %v2008 = vpop.f32.mrf.mxu0
    %v2009 = vadd.f32 %v1848, %v2008
    %v2010 = vpop.f32.mrf.mxu0
    %v2011 = vpop.f32.mrf.mxu0
    %v2012 = vadd.f32 %v1851, %v2011
    %v2013 = vpop.f32.mrf.mxu0
    %2014 = vmatprep.mubr.bf16.mxu0 %v1636
    %2015 = vmatmul.mubr.bf16.gmra.mxu0 %v1635
    %v2016 = vpop.f32.mrf.mxu0
    %v2017 = vadd.f32 %v1856, %v2016
    %v2018 = vpop.f32.mrf.mxu0
    %v2019 = vpop.f32.mrf.mxu0
    %v2020 = vadd.f32 %v1859, %v2019
    %v2021 = vpop.f32.mrf.mxu0
    %2022 = vdwg.mxu0
    %v2023 = vmax.f32 %v1897, 0.0
    %v2024 = vmax.f32 %v1900, 0.0
    %v2025 = vmax.f32 %v1905, 0.0
    %v2026 = vmax.f32 %v1908, 0.0
    %v2027 = vmax.f32 %v1913, 0.0
    %v2028 = vmax.f32 %v1916, 0.0
    %v2029 = vmax.f32 %v1921, 0.0
    %v2030 = vmax.f32 %v1924, 0.0
    %v2031 = vmax.f32 %v1929, 0.0
    %v2032 = vmax.f32 %v1932, 0.0
    %v2033 = vmax.f32 %v1937, 0.0
    %v2034 = vmax.f32 %v1940, 0.0
    %v2035 = vmax.f32 %v1945, 0.0
    %v2036 = vmax.f32 %v1948, 0.0
    %v2037 = vmax.f32 %v1953, 0.0
    %v2038 = vmax.f32 %v1956, 0.0
    %v2039 = vmax.f32 %v1961, 0.0
    %v2040 = vmax.f32 %v1964, 0.0
    %v2041 = vmax.f32 %v1969, 0.0
    %v2042 = vmax.f32 %v1972, 0.0
    %v2043 = vmax.f32 %v1977, 0.0
    %v2044 = vmax.f32 %v1980, 0.0
    %v2045 = vmax.f32 %v1985, 0.0
    %v2046 = vmax.f32 %v1988, 0.0
    %v2047 = vmax.f32 %v1993, 0.0
    %v2048 = vmax.f32 %v1996, 0.0
    %v2049 = vmax.f32 %v2001, 0.0
    %v2050 = vmax.f32 %v2004, 0.0
    %v2051 = vmax.f32 %v2009, 0.0
    %v2052 = vmax.f32 %v2012, 0.0
    %v2053 = vmax.f32 %v2017, 0.0
    %v2054 = vmax.f32 %v2020, 0.0
    %v2055 = vld [vmem:[%s5] sm:$0x3]
    %v2056 = vpack.c.bf16 %v2024, %v2023
    %v2057 = vpack.c.bf16 %v2026, %v2025
    %v2058 = vpack.c.bf16 %v2028, %v2027
    %v2059 = vpack.c.bf16 %v2030, %v2029
    %v2060 = vpack.c.bf16 %v2032, %v2031
    %v2061 = vpack.c.bf16 %v2034, %v2033
    %v2062 = vpack.c.bf16 %v2036, %v2035
    %v2063 = vpack.c.bf16 %v2038, %v2037
    %v2064 = vpack.c.bf16 %v2040, %v2039
    %v2065 = vpack.c.bf16 %v2042, %v2041
    %v2066 = vpack.c.bf16 %v2044, %v2043
    %v2067 = vpack.c.bf16 %v2046, %v2045
    %v2068 = vpack.c.bf16 %v2048, %v2047
    %v2069 = vpack.c.bf16 %v2050, %v2049
    %v2070 = vpack.c.bf16 %v2052, %v2051
    %v2071 = vpack.c.bf16 %v2054, %v2053
    %v2072 = vld [vmem:[#allocation2] sm:$0x1]
    %2074 = vset.pattern.permute.xlu0 0
    %2075 = vperm.xlu0 %2074, %v2072
    %v2076 = vpop.permute.xlu0 %2075
    %v2078 = vlaneseq
    %v2079 = vshrl.u32 %v2078, 7
    %v2080 = vsub.s32 0, %v2079
    %v2081 = vrot.slane %v2076, %v2080
    %v2084 = vunpack.c.l.s4 1966171168
    %v2085 = vunpack.c.0.s8 %v2084
    %v2086 = vlaneseq
    %v2087 = vshrl.u32 %v2086, 7
    %v2088 = vsub.s32 %v2085, %v2087
    %v2089 = vrot.slane %v2055, %v2088
    %v2090 = vcombine.high %v2089, %v2089
    %v2092 = vunpack.c.l.s4 1966171168
    %v2093 = vunpack.c.0.s8 %v2092
    %v2094 = vlaneseq
    %v2095 = vshrl.u32 %v2094, 7
    %v2096 = vsub.s32 %v2093, %v2095
    %v2097 = vrot.slane %v2089, %v2096
    %v2099 = vunpack.c.l.s4 1966171168
    %v2100 = vunpack.c.0.s8 %v2099
    %v2101 = vlaneseq
    %v2102 = vshrl.u32 %v2101, 7
    %v2103 = vsub.s32 %v2100, %v2102
    %v2104 = vrot.slane %v2090, %v2103
    %2107 = vmatprep.subr.bf16.mxu0 0
    %2108 = vmatpush1.bf16.msra.mxu0 %v2063
    %2109 = vmatprep.subr.bf16.mxu0 0
    %2110 = vmatpush1.bf16.msra.mxu0 %v2062
    %2111 = vmatprep.subr.bf16.mxu0 0
    %2112 = vmatpush1.bf16.msra.mxu0 %v2061
    %2113 = vmatprep.subr.bf16.mxu0 0
    %2114 = vmatpush1.bf16.msra.mxu0 %v2060
    %2115 = vmatprep.subr.bf16.mxu0 0
    %2116 = vmatpush1.bf16.msra.mxu0 %v2059
    %2117 = vmatprep.subr.bf16.mxu0 0
    %2118 = vmatpush1.bf16.msra.mxu0 %v2058
    %2119 = vmatprep.subr.bf16.mxu0 0
    %2120 = vmatpush1.bf16.msra.mxu0 %v2057
    %2121 = vmatprep.subr.bf16.mxu0 0
    %2122 = vmatpush1.bf16.msra.mxu0 %v2056
    %2123 = vmatprep.subr.bf16.mxu0 0
    %2124 = vmatpush2.bf16.msra.mxu0 %v2071
    %2125 = vmatprep.subr.bf16.mxu0 0
    %2126 = vmatpush2.bf16.msra.mxu0 %v2070
    %2127 = vmatprep.subr.bf16.mxu0 0
    %2128 = vmatpush2.bf16.msra.mxu0 %v2069
    %2129 = vmatprep.subr.bf16.mxu0 0
    %2130 = vmatpush2.bf16.msra.mxu0 %v2068
    %2131 = vmatprep.subr.bf16.mxu0 0
    %2132 = vmatpush2.bf16.msra.mxu0 %v2067
    %2133 = vmatprep.subr.bf16.mxu0 0
    %2134 = vmatpush2.bf16.msra.mxu0 %v2066
    %2135 = vmatprep.subr.bf16.mxu0 0
    %2136 = vmatpush2.bf16.msra.mxu0 %v2065
    %2137 = vmatprep.subr.bf16.mxu0 0
    %2138 = vmatpush2.bf16.msra.mxu0 %v2064
    %2139 = vmatprep.mubr.bf16.mxu0 %v2104
    %2140 = vmatmul.mubr.bf16.gmra.mxu0 %v2097
    %v2141 = vpop.f32.mrf.mxu0
    %v2142 = vadd.f32 %v2081, %v2141
    %v2143 = vpop.f32.mrf.mxu0
    %v2144 = vpop.f32.mrf.mxu0
    %v2145 = vpop.f32.mrf.mxu0
    %2146 = vdwg.mxu0
    %2147 = vst [vmem:[#allocation3] sm:$0x1] %v2142
    // Predicated region
    $region30: #{tpu_custom_call.1} parent=1 // pred_check
      _
    $region31: #{tpu_custom_call.1} parent=1 // pred_check_branch
      %2149 = sbr.rel (0) target = $region33
    $region32: #{tpu_custom_call.1} parent=1 // pred_region
      %s2151 = ssub.s32 16, 16
      %2152 = vsyncadd [#allocation4], %s2151
      %s2154 = sshll.u32 [#allocation3], 4
      %s2155 = int_to_ptr.vmem [resolvable:$true] %s2154
      %2157 = dma.vmem_to_hbm [thread:$0]  %s2155, 16, %s7, [#allocation4]
    $region33: #{tpu_custom_call.1} parent=1 // pred_fallthru
      _
    // Predicated region
    $region34: #{tpu_custom_call.1} parent=1 // pred_check
      _
    $region35: #{tpu_custom_call.1} parent=1 // pred_check_branch
      %2159 = sbr.rel (0) target = $region37
    $region36: #{tpu_custom_call.1} parent=1 // pred_region
      %2160 = dma.done [#allocation4], 16
    $region37: #{tpu_custom_call.1} parent=1 // pred_fallthru
      _
    %2161 = vsyncpa [#allocation4], 1

</llo_original>
